<compile_context>
chip_gen: v5e
topology: v5e:2x2
jax: 0.10.0
libtpu: 0.0.40
codegen_flags: <defaults>
</compile_context>

<pallas_src>
import functools

import jax
import jax.numpy as jnp
import numpy as np
from jax.experimental import pallas as pl
from jax.experimental.pallas import tpu as pltpu

# ----- Model hyper-parameters (mirror ContrastModel.__init__) -----
INPUT_DIM = 4
HIDDEN_DIM = (32, 32)
FC_DIM = 16
INPUT_LEN = 8        # T, also the BatchNorm1d channel count
NUM_LAYER = 1        # unused by forward
DROPOUT = 0.0        # unused by forward
BN_EPS = 1e-5


# ---------------------------------------------------------------------------
# Fused forward kernel (single program; everything VMEM/SMEM resident)
# ---------------------------------------------------------------------------
def contrast_kernel(x_ref,                        # (T*Bp, Dp)            f32
                    wih1_ref, whh1_ref, b1_ref,   # (Dp,4H1) f32, (4H1,4H1) bf16 zero-pad rows, (1,4H1) f32
                    wih2_ref, whh2_ref, b2_ref,   # (4H1,4H2) f32 zero-pad rows, (4H2,4H2) bf16 zero-pad rows, (1,4H2) f32
                    gamma_ref, beta_ref,          # (T,) f32 in SMEM
                    fw1_ref, fb1_ref, fw2_ref, fb2_ref,   # f32 (fw1 zero-pad rows)
                    out_ref,                      # (Bp, 2) f32
                    *, b_real):
    T = gamma_ref.shape[0]
    B = x_ref.shape[0] // T
    G1 = whh1_ref.shape[0]
    G2 = whh2_ref.shape[0]
    H1, H2 = G1 // 4, G2 // 4

    def gate_consts(G, H):
        # Lanes [2H,3H) are the g block (plain tanh); all other gates are
        # sigmoid(x) = 0.5*tanh(0.5*x) + 0.5  -> pre-scale == post-scale.
        lane = jax.lax.broadcasted_iota(jnp.int32, (B, G), 1)
        is_g = (lane >= 2 * H) & (lane < 3 * H)
        s_pre = jnp.where(is_g, 1.0, 0.5).astype(jnp.float32)
        s_add = jnp.where(is_g, 0.0, 0.5).astype(jnp.float32)
        return s_pre, s_add

    def bn_mask(G, H):
        # 1.0 for real batch rows and real hidden lanes (for BN statistics).
        row = jax.lax.broadcasted_iota(jnp.int32, (B, G), 0)
        lane = jax.lax.broadcasted_iota(jnp.int32, (B, G), 1)
        return ((row < b_real) & (lane < H)).astype(jnp.float32)

    def bn_stats(v, mask, inv_n):
        # One-pass batch statistics (biased var, torch training mode). Safe
        # here: the values are tanh/sigmoid-bounded LSTM outputs.
        vm = v * mask
        mean = jnp.sum(vm, axis=(0, 1), keepdims=True) * inv_n
        ex2 = jnp.sum(vm * vm, axis=(0, 1), keepdims=True) * inv_n
        return mean, ex2 - mean * mean

    def lstm_step(gates, h, c, s_pre, s_add, H):
        # Single EUP op for all four gate activations.
        act = jnp.tanh(gates * s_pre) * s_pre + s_add
        # Align f/g/o groups onto lanes [0,H) via XLU rotates (i is already there).
        f_al = pltpu.roll(act, shift=3 * H, axis=1)
        g_al = pltpu.roll(act, shift=2 * H, axis=1)
        o_al = pltpu.roll(act, shift=1 * H, axis=1)
        c = f_al * c + act * g_al
        h = o_al * jnp.tanh(c)
        return h, c                      # valid in lanes [0,H); junk lanes never feed back

    # ----- LSTM layer 1: batched f32 input projection, then unrolled recurrence -----
    xp1 = (jnp.dot(x_ref[...], wih1_ref[...], preferred_element_type=jnp.float32)
           + b1_ref[...])                                   # (T*B, G1)
    whh1 = whh1_ref[...]                                    # bf16, hoisted (zero rows kill junk lanes)
    s_pre1, s_add1 = gate_consts(G1, H1)
    mask1 = bn_mask(G1, H1)
    inv_n1 = 1.0 / float(b_real * H1)
    b2 = b2_ref[...]

    h1 = jnp.zeros((B, G1), jnp.float32)
    c1 = jnp.zeros((B, G1), jnp.float32)
    xp2 = []                                                # per-step layer-2 inputs (vregs)
    for t in range(T):                                      # static unroll (T fixed)
        xt = xp1[t * B:(t + 1) * B]                         # static, sublane-aligned slice
        if t == 0:
            gates = xt                                      # h0 == 0 -> skip recurrent matmul
        else:
            gates = xt + jnp.dot(h1.astype(jnp.bfloat16), whh1,
                                 preferred_element_type=jnp.float32)
        h1, c1 = lstm_step(gates, h1, c1, s_pre1, s_add1, H1)
        # BatchNorm1d channel t depends only on this step's (batch, hidden)
        # slab: normalize + project into layer 2 right here (no seq scratch).
        mean, var = bn_stats(h1, mask1, inv_n1)
        s1_t = (h1 - mean) * jax.lax.rsqrt(var + BN_EPS) * gamma_ref[t] + beta_ref[t]
        xp2.append(jnp.dot(s1_t, wih2_ref[...],
                           preferred_element_type=jnp.float32) + b2)

    # ----- LSTM layer 2: unrolled recurrence; only the final h is needed downstream -----
    whh2 = whh2_ref[...]                                    # bf16, hoisted
    s_pre2, s_add2 = gate_consts(G2, H2)
    h2 = jnp.zeros((B, G2), jnp.float32)
    c2 = jnp.zeros((B, G2), jnp.float32)
    for t in range(T):
        if t == 0:
            gates = xp2[0]
        else:
            gates = xp2[t] + jnp.dot(h2.astype(jnp.bfloat16), whh2,
                                     preferred_element_type=jnp.float32)
        h2, c2 = lstm_step(gates, h2, c2, s_pre2, s_add2, H2)

    # ----- BatchNorm #2 on the last time step only (the only one the head reads) -----
    mask2 = bn_mask(G2, H2)
    mean2, var2 = bn_stats(h2, mask2, 1.0 / float(b_real * H2))
    s2_last = ((h2 - mean2) * jax.lax.rsqrt(var2 + BN_EPS)
               * gamma_ref[T - 1] + beta_ref[T - 1])

    # ----- FC head + softmax(dim=1), f32 (fw1's zero pad rows kill junk lanes) -----
    hmid = jnp.maximum(
        jnp.dot(s2_last, fw1_ref[...], preferred_element_type=jnp.float32)
        + fb1_ref[...], 0.0)                                # (B, FC_DIM)
    logits = (jnp.dot(hmid, fw2_ref[...], preferred_element_type=jnp.float32)
              + fb2_ref[...])                               # (B, 2)
    m = jnp.max(logits, axis=1, keepdims=True)
    e = jnp.exp(logits - m)
    out_ref[...] = e / jnp.sum(e, axis=1, keepdims=True)    # exact: rows sum to 1


# ---------------------------------------------------------------------------
# Wrapper (glue: transpose / pad / parameter re-packing only)
# ---------------------------------------------------------------------------
def contrast_forward(seq, params):
    B = seq.shape[0]
    x = seq.reshape(B, -1, INPUT_DIM).astype(jnp.float32)   # == seq.view(B, -1, input_dim)
    T = x.shape[1]
    H1, H2 = HIDDEN_DIM
    Bp = max(8, ((B + 7) // 8) * 8)                         # pad batch to 8-sublane multiple
    Dp = 8                                                  # pad feature dim to one f32 sublane tile

    x_tm = jnp.transpose(x, (1, 0, 2))                      # time-major (T, B, D)
    x_tm = jnp.pad(x_tm, ((0, 0), (0, Bp - B), (0, Dp - INPUT_DIM)))
    x_flat = x_tm.reshape(T * Bp, Dp)                       # layout-free (Bp % 8 == 0)

    def pad_rows(w_t, rows_total):                          # zero-pad contraction rows
        return jnp.pad(w_t, ((0, rows_total - w_t.shape[0]), (0, 0)))

    wih1_p = pad_rows(params["w_ih1"].T, Dp)                               # (Dp, 4H1)   f32
    whh1_p = pad_rows(params["w_hh1"].T, 4 * H1).astype(jnp.bfloat16)      # (4H1, 4H1)  rows [H1:] zero
    b1 = (params["b_ih1"] + params["b_hh1"]).reshape(1, 4 * H1)
    wih2_p = pad_rows(params["w_ih2"].T, 4 * H1)                           # (4H1, 4H2)  rows [H1:] zero, f32
    whh2_p = pad_rows(params["w_hh2"].T, 4 * H2).astype(jnp.bfloat16)      # (4H2, 4H2)  rows [H2:] zero
    b2 = (params["b_ih2"] + params["b_hh2"]).reshape(1, 4 * H2)
    gamma = params["bn_gamma"].reshape(T).astype(jnp.float32)              # (T,) SMEM scalars
    beta = params["bn_beta"].reshape(T).astype(jnp.float32)
    fw1_p = pad_rows(params["fc_w1"].T, 4 * H2)                            # (4H2, FC_DIM) rows [H2:] zero
    fb1 = params["fc_b1"].reshape(1, FC_DIM)
    fw2_t = params["fc_w2"].T                                              # (FC_DIM, 2)
    fb2 = params["fc_b2"].reshape(1, 2)

    kernel = functools.partial(contrast_kernel, b_real=B)
    vmem = pl.BlockSpec(memory_space=pltpu.MemorySpace.VMEM)
    smem = pl.BlockSpec(memory_space=pltpu.MemorySpace.SMEM)

    out = pl.pallas_call(
        kernel,
        out_shape=jax.ShapeDtypeStruct((Bp, 2), jnp.float32),
        in_specs=[vmem] * 7 + [smem, smem] + [vmem] * 4,
        out_specs=vmem,
    )(x_flat, wih1_p, whh1_p, b1, wih2_p, whh2_p, b2,
      gamma, beta, fw1_p, fb1, fw2_t, fb2)
    return out[:B]


# ---------------------------------------------------------------------------
# Deterministic parameter init (synthetic; PyTorch-layout shapes)
# ---------------------------------------------------------------------------
def init_params(key):
    H1, H2 = HIDDEN_DIM
    ks = jax.random.split(key, 12)

    def u(k, shape, scale):
        return jax.random.uniform(k, shape, jnp.float32, -scale, scale)

    s1 = 1.0 / np.sqrt(H1)
    s2 = 1.0 / np.sqrt(H2)
    return {
        "w_ih1": u(ks[0], (4 * H1, INPUT_DIM), s1),
        "w_hh1": u(ks[1], (4 * H1, H1), s1),
        "b_ih1": u(ks[2], (4 * H1,), s1),
        "b_hh1": u(ks[3], (4 * H1,), s1),
        "w_ih2": u(ks[4], (4 * H2, H1), s2),
        "w_hh2": u(ks[5], (4 * H2, H2), s2),
        "b_ih2": u(ks[6], (4 * H2,), s2),
        "b_hh2": u(ks[7], (4 * H2,), s2),
        "bn_gamma": jnp.ones((INPUT_LEN,), jnp.float32),   # BatchNorm1d default weight
        "bn_beta": jnp.zeros((INPUT_LEN,), jnp.float32),   # BatchNorm1d default bias
        "fc_w1": u(ks[8], (FC_DIM, H2), 1.0 / np.sqrt(H2)),
        "fc_b1": u(ks[9], (FC_DIM,), 1.0 / np.sqrt(H2)),
        "fc_w2": u(ks[10], (2, FC_DIM), 1.0 / np.sqrt(FC_DIM)),
        "fc_b2": u(ks[11], (2,), 1.0 / np.sqrt(FC_DIM)),
    }


# ---------------------------------------------------------------------------
# Pure-JAX reference (mirrors the PyTorch forward) for a correctness check
# ---------------------------------------------------------------------------
def reference_forward(seq, p):
    B = seq.shape[0]
    x = seq.reshape(B, -1, INPUT_DIM).astype(jnp.float32)
    H1, H2 = HIDDEN_DIM

    def lstm(inp, wih, whh, bih, bhh, H):
        Bb = inp.shape[0]

        def step(carry, xt):
            h, c = carry
            g = xt @ wih.T + bih + h @ whh.T + bhh
            i, f, gg, o = jnp.split(g, 4, axis=-1)
            c = jax.nn.sigmoid(f) * c + jax.nn.sigmoid(i) * jnp.tanh(gg)
            h = jax.nn.sigmoid(o) * jnp.tanh(c)
            return (h, c), h

        h0 = jnp.zeros((Bb, H), jnp.float32)
        _, ys = jax.lax.scan(step, (h0, h0), jnp.transpose(inp, (1, 0, 2)))
        return jnp.transpose(ys, (1, 0, 2))

    def bn(xx):
        mean = jnp.mean(xx, axis=(0, 2), keepdims=True)
        var = jnp.mean((xx - mean) ** 2, axis=(0, 2), keepdims=True)
        return ((xx - mean) / jnp.sqrt(var + BN_EPS)
                * p["bn_gamma"][None, :, None] + p["bn_beta"][None, :, None])

    o1 = bn(lstm(x, p["w_ih1"], p["w_hh1"], p["b_ih1"], p["b_hh1"], H1))
    o2 = bn(lstm(o1, p["w_ih2"], p["w_hh2"], p["b_ih2"], p["b_hh2"], H2))
    fc_in = o2[:, -1, :]
    hmid = jax.nn.relu(fc_in @ p["fc_w1"].T + p["fc_b1"])
    logits = hmid @ p["fc_w2"].T + p["fc_b2"]
    return jax.nn.softmax(logits, axis=1)


if __name__ == "__main__":
    key = jax.random.PRNGKey(0)
    pkey, xkey = jax.random.split(key)
    params = init_params(pkey)

    # Input matches the module: (B, input_len * input_dim); forward .view()s it.
    seq = jax.random.normal(xkey, (2, INPUT_LEN * INPUT_DIM), jnp.float32)

    out = jax.block_until_ready(contrast_forward(seq, params))
    ref = jax.block_until_ready(reference_forward(seq, params))

    assert out.shape == (2, 2)
    assert bool(jnp.all(jnp.isfinite(out)))
    np.testing.assert_allclose(np.asarray(out), np.asarray(ref), rtol=1e-2, atol=1e-2)
    print("KERNEL_OK")
</pallas_src>

<mosaic_0001>
module attributes {stable_mosaic.version = 11 : i64} {
  func.func @contrast_kernel(%arg0: memref<64x8xf32, #tpu.memory_space<vmem>>, %arg1: memref<8x128xf32, #tpu.memory_space<vmem>>, %arg2: memref<128x128xbf16, #tpu.memory_space<vmem>>, %arg3: memref<1x128xf32, #tpu.memory_space<vmem>>, %arg4: memref<128x128xf32, #tpu.memory_space<vmem>>, %arg5: memref<128x128xbf16, #tpu.memory_space<vmem>>, %arg6: memref<1x128xf32, #tpu.memory_space<vmem>>, %arg7: memref<8xf32, #tpu.memory_space<smem>>, %arg8: memref<8xf32, #tpu.memory_space<smem>>, %arg9: memref<128x16xf32, #tpu.memory_space<vmem>>, %arg10: memref<1x16xf32, #tpu.memory_space<vmem>>, %arg11: memref<16x2xf32, #tpu.memory_space<vmem>>, %arg12: memref<1x2xf32, #tpu.memory_space<vmem>>, %arg13: memref<8x2xf32, #tpu.memory_space<vmem>>) attributes {dimension_semantics = [], scalar_prefetch = 0 : i64, scratch_operands = 0 : i64, tpu.core_type = #tpu.core_type<tc>} {
    %c0 = arith.constant 0 : index
    %c0_0 = arith.constant 0 : index
    %0 = vector.load %arg0[%c0, %c0_0] : memref<64x8xf32, #tpu.memory_space<vmem>>, vector<64x8xf32>
    %c0_1 = arith.constant 0 : index
    %c0_2 = arith.constant 0 : index
    %1 = vector.load %arg1[%c0_1, %c0_2] : memref<8x128xf32, #tpu.memory_space<vmem>>, vector<8x128xf32>
    %cst = arith.constant dense<0.000000e+00> : vector<64x128xf32>
    %2 = tpu.matmul %0, %1, %cst {dimension_numbers = #tpu.dot_dimension_numbers<[1], [0], [0], [1], [0, 0, 1, 1], [], []>} : vector<64x8xf32>, vector<8x128xf32>, vector<64x128xf32> -> vector<64x128xf32>
    %c0_3 = arith.constant 0 : index
    %c0_4 = arith.constant 0 : index
    %3 = vector.load %arg3[%c0_3, %c0_4] : memref<1x128xf32, #tpu.memory_space<vmem>>, vector<1x128xf32>
    %4 = vector.broadcast %3 : vector<1x128xf32> to vector<64x128xf32>
    %5 = arith.addf %2, %4 : vector<64x128xf32>
    %c0_5 = arith.constant 0 : index
    %c0_6 = arith.constant 0 : index
    %6 = vector.load %arg2[%c0_5, %c0_6] : memref<128x128xbf16, #tpu.memory_space<vmem>>, vector<128x128xbf16>
    %7 = tpu.iota {dimensions = array<i32: 1>} : vector<8x128xi32>
    %c64_i32 = arith.constant 64 : i32
    %8 = vector.broadcast %c64_i32 : i32 to vector<8x128xi32>
    %9 = arith.cmpi sge, %7, %8 : vector<8x128xi32>
    %c96_i32 = arith.constant 96 : i32
    %10 = vector.broadcast %c96_i32 : i32 to vector<8x128xi32>
    %11 = arith.cmpi slt, %7, %10 : vector<8x128xi32>
    %12 = arith.andi %9, %11 : vector<8x128xi1>
    %cst_7 = arith.constant 1.000000e+00 : f32
    %cst_8 = arith.constant 5.000000e-01 : f32
    %13 = vector.broadcast %cst_7 : f32 to vector<8x128xf32>
    %14 = vector.broadcast %cst_8 : f32 to vector<8x128xf32>
    %15 = arith.select %12, %13, %14 : vector<8x128xi1>, vector<8x128xf32>
    %cst_9 = arith.constant 0.000000e+00 : f32
    %cst_10 = arith.constant 5.000000e-01 : f32
    %16 = vector.broadcast %cst_9 : f32 to vector<8x128xf32>
    %17 = vector.broadcast %cst_10 : f32 to vector<8x128xf32>
    %18 = arith.select %12, %16, %17 : vector<8x128xi1>, vector<8x128xf32>
    %19 = tpu.iota {dimensions = array<i32: 0>} : vector<8x128xi32>
    %20 = tpu.iota {dimensions = array<i32: 1>} : vector<8x128xi32>
    %c2_i32 = arith.constant 2 : i32
    %21 = vector.broadcast %c2_i32 : i32 to vector<8x128xi32>
    %22 = arith.cmpi slt, %19, %21 : vector<8x128xi32>
    %c32_i32 = arith.constant 32 : i32
    %23 = vector.broadcast %c32_i32 : i32 to vector<8x128xi32>
    %24 = arith.cmpi slt, %20, %23 : vector<8x128xi32>
    %25 = arith.andi %22, %24 : vector<8x128xi1>
    %26 = arith.extui %25 : vector<8x128xi1> to vector<8x128xi32>
    %27 = arith.sitofp %26 : vector<8x128xi32> to vector<8x128xf32>
    %c0_11 = arith.constant 0 : index
    %c0_12 = arith.constant 0 : index
    %28 = vector.load %arg6[%c0_11, %c0_12] : memref<1x128xf32, #tpu.memory_space<vmem>>, vector<1x128xf32>
    %cst_13 = arith.constant 0.000000e+00 : f32
    %29 = vector.broadcast %cst_13 : f32 to vector<8x128xf32>
    %30 = vector.extract_strided_slice %5 {offsets = [0, 0], sizes = [8, 128], strides = [1, 1]} : vector<64x128xf32> to vector<8x128xf32>
    %31 = arith.mulf %30, %15 : vector<8x128xf32>
    %32 = math.tanh %31 : vector<8x128xf32>
    %33 = arith.mulf %32, %15 : vector<8x128xf32>
    %34 = arith.addf %33, %18 : vector<8x128xf32>
    %c96_i32_14 = arith.constant 96 : i32
    %35 = tpu.dynamic_rotate %34 by %c96_i32_14 dim 1 : vector<8x128xf32>, i32 -> vector<8x128xf32>
    %c64_i32_15 = arith.constant 64 : i32
    %36 = tpu.dynamic_rotate %34 by %c64_i32_15 dim 1 : vector<8x128xf32>, i32 -> vector<8x128xf32>
    %c32_i32_16 = arith.constant 32 : i32
    %37 = tpu.dynamic_rotate %34 by %c32_i32_16 dim 1 : vector<8x128xf32>, i32 -> vector<8x128xf32>
    %38 = arith.mulf %35, %29 : vector<8x128xf32>
    %39 = arith.mulf %34, %36 : vector<8x128xf32>
    %40 = arith.addf %38, %39 : vector<8x128xf32>
    %41 = math.tanh %40 : vector<8x128xf32>
    %42 = arith.mulf %37, %41 : vector<8x128xf32>
    %43 = arith.mulf %42, %27 : vector<8x128xf32>
    %44 = vector.shape_cast %43 : vector<8x128xf32> to vector<1x8x128xf32>
    %cst_17 = arith.constant dense<0.000000e+00> : vector<1xf32>
    %45 = vector.multi_reduction <add>, %44, %cst_17 [1, 2] : vector<1x8x128xf32> to vector<1xf32>
    %46 = vector.shape_cast %45 : vector<1xf32> to vector<1x1x1xf32>
    %47 = vector.extract %46[0, 0, 0] : f32 from vector<1x1x1xf32>
    %48 = vector.broadcast %47 : f32 to vector<1x1xf32>
    %cst_18 = arith.constant 1.562500e-02 : f32
    %49 = vector.broadcast %cst_18 : f32 to vector<1x1xf32>
    %50 = arith.mulf %48, %49 : vector<1x1xf32>
    %51 = arith.mulf %43, %43 : vector<8x128xf32>
    %52 = vector.shape_cast %51 : vector<8x128xf32> to vector<1x8x128xf32>
    %cst_19 = arith.constant dense<0.000000e+00> : vector<1xf32>
    %53 = vector.multi_reduction <add>, %52, %cst_19 [1, 2] : vector<1x8x128xf32> to vector<1xf32>
    %54 = vector.shape_cast %53 : vector<1xf32> to vector<1x1x1xf32>
    %55 = vector.extract %54[0, 0, 0] : f32 from vector<1x1x1xf32>
    %56 = vector.broadcast %55 : f32 to vector<1x1xf32>
    %cst_20 = arith.constant 1.562500e-02 : f32
    %57 = vector.broadcast %cst_20 : f32 to vector<1x1xf32>
    %58 = arith.mulf %56, %57 : vector<1x1xf32>
    %59 = arith.mulf %50, %50 : vector<1x1xf32>
    %60 = arith.subf %58, %59 : vector<1x1xf32>
    %61 = vector.broadcast %50 : vector<1x1xf32> to vector<8x128xf32>
    %62 = arith.subf %42, %61 : vector<8x128xf32>
    %cst_21 = arith.constant 9.99999974E-6 : f32
    %63 = vector.broadcast %cst_21 : f32 to vector<1x1xf32>
    %64 = arith.addf %60, %63 : vector<1x1xf32>
    %65 = math.rsqrt %64 : vector<1x1xf32>
    %66 = vector.broadcast %65 : vector<1x1xf32> to vector<8x128xf32>
    %67 = arith.mulf %62, %66 : vector<8x128xf32>
    %c0_22 = arith.constant 0 : index
    %68 = memref.load %arg7[%c0_22] : memref<8xf32, #tpu.memory_space<smem>>
    %69 = vector.broadcast %68 : f32 to vector<8x128xf32>
    %70 = arith.mulf %67, %69 : vector<8x128xf32>
    %c0_23 = arith.constant 0 : index
    %71 = memref.load %arg8[%c0_23] : memref<8xf32, #tpu.memory_space<smem>>
    %72 = vector.broadcast %71 : f32 to vector<8x128xf32>
    %73 = arith.addf %70, %72 : vector<8x128xf32>
    %c0_24 = arith.constant 0 : index
    %c0_25 = arith.constant 0 : index
    %74 = vector.load %arg4[%c0_24, %c0_25] : memref<128x128xf32, #tpu.memory_space<vmem>>, vector<128x128xf32>
    %cst_26 = arith.constant dense<0.000000e+00> : vector<8x128xf32>
    %75 = tpu.matmul %73, %74, %cst_26 {dimension_numbers = #tpu.dot_dimension_numbers<[1], [0], [0], [1], [0, 0, 1, 1], [], []>} : vector<8x128xf32>, vector<128x128xf32>, vector<8x128xf32> -> vector<8x128xf32>
    %76 = vector.broadcast %28 : vector<1x128xf32> to vector<8x128xf32>
    %77 = arith.addf %75, %76 : vector<8x128xf32>
    %78 = vector.extract_strided_slice %5 {offsets = [8, 0], sizes = [8, 128], strides = [1, 1]} : vector<64x128xf32> to vector<8x128xf32>
    %79 = arith.truncf %42 : vector<8x128xf32> to vector<8x128xbf16>
    %cst_27 = arith.constant dense<0.000000e+00> : vector<8x128xf32>
    %80 = tpu.matmul %79, %6, %cst_27 {dimension_numbers = #tpu.dot_dimension_numbers<[1], [0], [0], [1], [0, 0, 1, 1], [], []>} : vector<8x128xbf16>, vector<128x128xbf16>, vector<8x128xf32> -> vector<8x128xf32>
    %81 = arith.addf %78, %80 : vector<8x128xf32>
    %82 = arith.mulf %81, %15 : vector<8x128xf32>
    %83 = math.tanh %82 : vector<8x128xf32>
    %84 = arith.mulf %83, %15 : vector<8x128xf32>
    %85 = arith.addf %84, %18 : vector<8x128xf32>
    %c96_i32_28 = arith.constant 96 : i32
    %86 = tpu.dynamic_rotate %85 by %c96_i32_28 dim 1 : vector<8x128xf32>, i32 -> vector<8x128xf32>
    %c64_i32_29 = arith.constant 64 : i32
    %87 = tpu.dynamic_rotate %85 by %c64_i32_29 dim 1 : vector<8x128xf32>, i32 -> vector<8x128xf32>
    %c32_i32_30 = arith.constant 32 : i32
    %88 = tpu.dynamic_rotate %85 by %c32_i32_30 dim 1 : vector<8x128xf32>, i32 -> vector<8x128xf32>
    %89 = arith.mulf %86, %40 : vector<8x128xf32>
    %90 = arith.mulf %85, %87 : vector<8x128xf32>
    %91 = arith.addf %89, %90 : vector<8x128xf32>
    %92 = math.tanh %91 : vector<8x128xf32>
    %93 = arith.mulf %88, %92 : vector<8x128xf32>
    %94 = arith.mulf %93, %27 : vector<8x128xf32>
    %95 = vector.shape_cast %94 : vector<8x128xf32> to vector<1x8x128xf32>
    %cst_31 = arith.constant dense<0.000000e+00> : vector<1xf32>
    %96 = vector.multi_reduction <add>, %95, %cst_31 [1, 2] : vector<1x8x128xf32> to vector<1xf32>
    %97 = vector.shape_cast %96 : vector<1xf32> to vector<1x1x1xf32>
    %98 = vector.extract %97[0, 0, 0] : f32 from vector<1x1x1xf32>
    %99 = vector.broadcast %98 : f32 to vector<1x1xf32>
    %cst_32 = arith.constant 1.562500e-02 : f32
    %100 = vector.broadcast %cst_32 : f32 to vector<1x1xf32>
    %101 = arith.mulf %99, %100 : vector<1x1xf32>
    %102 = arith.mulf %94, %94 : vector<8x128xf32>
    %103 = vector.shape_cast %102 : vector<8x128xf32> to vector<1x8x128xf32>
    %cst_33 = arith.constant dense<0.000000e+00> : vector<1xf32>
    %104 = vector.multi_reduction <add>, %103, %cst_33 [1, 2] : vector<1x8x128xf32> to vector<1xf32>
    %105 = vector.shape_cast %104 : vector<1xf32> to vector<1x1x1xf32>
    %106 = vector.extract %105[0, 0, 0] : f32 from vector<1x1x1xf32>
    %107 = vector.broadcast %106 : f32 to vector<1x1xf32>
    %cst_34 = arith.constant 1.562500e-02 : f32
    %108 = vector.broadcast %cst_34 : f32 to vector<1x1xf32>
    %109 = arith.mulf %107, %108 : vector<1x1xf32>
    %110 = arith.mulf %101, %101 : vector<1x1xf32>
    %111 = arith.subf %109, %110 : vector<1x1xf32>
    %112 = vector.broadcast %101 : vector<1x1xf32> to vector<8x128xf32>
    %113 = arith.subf %93, %112 : vector<8x128xf32>
    %cst_35 = arith.constant 9.99999974E-6 : f32
    %114 = vector.broadcast %cst_35 : f32 to vector<1x1xf32>
    %115 = arith.addf %111, %114 : vector<1x1xf32>
    %116 = math.rsqrt %115 : vector<1x1xf32>
    %117 = vector.broadcast %116 : vector<1x1xf32> to vector<8x128xf32>
    %118 = arith.mulf %113, %117 : vector<8x128xf32>
    %c1 = arith.constant 1 : index
    %119 = memref.load %arg7[%c1] : memref<8xf32, #tpu.memory_space<smem>>
    %120 = vector.broadcast %119 : f32 to vector<8x128xf32>
    %121 = arith.mulf %118, %120 : vector<8x128xf32>
    %c1_36 = arith.constant 1 : index
    %122 = memref.load %arg8[%c1_36] : memref<8xf32, #tpu.memory_space<smem>>
    %123 = vector.broadcast %122 : f32 to vector<8x128xf32>
    %124 = arith.addf %121, %123 : vector<8x128xf32>
    %c0_37 = arith.constant 0 : index
    %c0_38 = arith.constant 0 : index
    %125 = vector.load %arg4[%c0_37, %c0_38] : memref<128x128xf32, #tpu.memory_space<vmem>>, vector<128x128xf32>
    %cst_39 = arith.constant dense<0.000000e+00> : vector<8x128xf32>
    %126 = tpu.matmul %124, %125, %cst_39 {dimension_numbers = #tpu.dot_dimension_numbers<[1], [0], [0], [1], [0, 0, 1, 1], [], []>} : vector<8x128xf32>, vector<128x128xf32>, vector<8x128xf32> -> vector<8x128xf32>
    %127 = vector.broadcast %28 : vector<1x128xf32> to vector<8x128xf32>
    %128 = arith.addf %126, %127 : vector<8x128xf32>
    %129 = vector.extract_strided_slice %5 {offsets = [16, 0], sizes = [8, 128], strides = [1, 1]} : vector<64x128xf32> to vector<8x128xf32>
    %130 = arith.truncf %93 : vector<8x128xf32> to vector<8x128xbf16>
    %cst_40 = arith.constant dense<0.000000e+00> : vector<8x128xf32>
    %131 = tpu.matmul %130, %6, %cst_40 {dimension_numbers = #tpu.dot_dimension_numbers<[1], [0], [0], [1], [0, 0, 1, 1], [], []>} : vector<8x128xbf16>, vector<128x128xbf16>, vector<8x128xf32> -> vector<8x128xf32>
    %132 = arith.addf %129, %131 : vector<8x128xf32>
    %133 = arith.mulf %132, %15 : vector<8x128xf32>
    %134 = math.tanh %133 : vector<8x128xf32>
    %135 = arith.mulf %134, %15 : vector<8x128xf32>
    %136 = arith.addf %135, %18 : vector<8x128xf32>
    %c96_i32_41 = arith.constant 96 : i32
    %137 = tpu.dynamic_rotate %136 by %c96_i32_41 dim 1 : vector<8x128xf32>, i32 -> vector<8x128xf32>
    %c64_i32_42 = arith.constant 64 : i32
    %138 = tpu.dynamic_rotate %136 by %c64_i32_42 dim 1 : vector<8x128xf32>, i32 -> vector<8x128xf32>
    %c32_i32_43 = arith.constant 32 : i32
    %139 = tpu.dynamic_rotate %136 by %c32_i32_43 dim 1 : vector<8x128xf32>, i32 -> vector<8x128xf32>
    %140 = arith.mulf %137, %91 : vector<8x128xf32>
    %141 = arith.mulf %136, %138 : vector<8x128xf32>
    %142 = arith.addf %140, %141 : vector<8x128xf32>
    %143 = math.tanh %142 : vector<8x128xf32>
    %144 = arith.mulf %139, %143 : vector<8x128xf32>
    %145 = arith.mulf %144, %27 : vector<8x128xf32>
    %146 = vector.shape_cast %145 : vector<8x128xf32> to vector<1x8x128xf32>
    %cst_44 = arith.constant dense<0.000000e+00> : vector<1xf32>
    %147 = vector.multi_reduction <add>, %146, %cst_44 [1, 2] : vector<1x8x128xf32> to vector<1xf32>
    %148 = vector.shape_cast %147 : vector<1xf32> to vector<1x1x1xf32>
    %149 = vector.extract %148[0, 0, 0] : f32 from vector<1x1x1xf32>
    %150 = vector.broadcast %149 : f32 to vector<1x1xf32>
    %cst_45 = arith.constant 1.562500e-02 : f32
    %151 = vector.broadcast %cst_45 : f32 to vector<1x1xf32>
    %152 = arith.mulf %150, %151 : vector<1x1xf32>
    %153 = arith.mulf %145, %145 : vector<8x128xf32>
    %154 = vector.shape_cast %153 : vector<8x128xf32> to vector<1x8x128xf32>
    %cst_46 = arith.constant dense<0.000000e+00> : vector<1xf32>
    %155 = vector.multi_reduction <add>, %154, %cst_46 [1, 2] : vector<1x8x128xf32> to vector<1xf32>
    %156 = vector.shape_cast %155 : vector<1xf32> to vector<1x1x1xf32>
    %157 = vector.extract %156[0, 0, 0] : f32 from vector<1x1x1xf32>
    %158 = vector.broadcast %157 : f32 to vector<1x1xf32>
    %cst_47 = arith.constant 1.562500e-02 : f32
    %159 = vector.broadcast %cst_47 : f32 to vector<1x1xf32>
    %160 = arith.mulf %158, %159 : vector<1x1xf32>
    %161 = arith.mulf %152, %152 : vector<1x1xf32>
    %162 = arith.subf %160, %161 : vector<1x1xf32>
    %163 = vector.broadcast %152 : vector<1x1xf32> to vector<8x128xf32>
    %164 = arith.subf %144, %163 : vector<8x128xf32>
    %cst_48 = arith.constant 9.99999974E-6 : f32
    %165 = vector.broadcast %cst_48 : f32 to vector<1x1xf32>
    %166 = arith.addf %162, %165 : vector<1x1xf32>
    %167 = math.rsqrt %166 : vector<1x1xf32>
    %168 = vector.broadcast %167 : vector<1x1xf32> to vector<8x128xf32>
    %169 = arith.mulf %164, %168 : vector<8x128xf32>
    %c2 = arith.constant 2 : index
    %170 = memref.load %arg7[%c2] : memref<8xf32, #tpu.memory_space<smem>>
    %171 = vector.broadcast %170 : f32 to vector<8x128xf32>
    %172 = arith.mulf %169, %171 : vector<8x128xf32>
    %c2_49 = arith.constant 2 : index
    %173 = memref.load %arg8[%c2_49] : memref<8xf32, #tpu.memory_space<smem>>
    %174 = vector.broadcast %173 : f32 to vector<8x128xf32>
    %175 = arith.addf %172, %174 : vector<8x128xf32>
    %c0_50 = arith.constant 0 : index
    %c0_51 = arith.constant 0 : index
    %176 = vector.load %arg4[%c0_50, %c0_51] : memref<128x128xf32, #tpu.memory_space<vmem>>, vector<128x128xf32>
    %cst_52 = arith.constant dense<0.000000e+00> : vector<8x128xf32>
    %177 = tpu.matmul %175, %176, %cst_52 {dimension_numbers = #tpu.dot_dimension_numbers<[1], [0], [0], [1], [0, 0, 1, 1], [], []>} : vector<8x128xf32>, vector<128x128xf32>, vector<8x128xf32> -> vector<8x128xf32>
    %178 = vector.broadcast %28 : vector<1x128xf32> to vector<8x128xf32>
    %179 = arith.addf %177, %178 : vector<8x128xf32>
    %180 = vector.extract_strided_slice %5 {offsets = [24, 0], sizes = [8, 128], strides = [1, 1]} : vector<64x128xf32> to vector<8x128xf32>
    %181 = arith.truncf %144 : vector<8x128xf32> to vector<8x128xbf16>
    %cst_53 = arith.constant dense<0.000000e+00> : vector<8x128xf32>
    %182 = tpu.matmul %181, %6, %cst_53 {dimension_numbers = #tpu.dot_dimension_numbers<[1], [0], [0], [1], [0, 0, 1, 1], [], []>} : vector<8x128xbf16>, vector<128x128xbf16>, vector<8x128xf32> -> vector<8x128xf32>
    %183 = arith.addf %180, %182 : vector<8x128xf32>
    %184 = arith.mulf %183, %15 : vector<8x128xf32>
    %185 = math.tanh %184 : vector<8x128xf32>
    %186 = arith.mulf %185, %15 : vector<8x128xf32>
    %187 = arith.addf %186, %18 : vector<8x128xf32>
    %c96_i32_54 = arith.constant 96 : i32
    %188 = tpu.dynamic_rotate %187 by %c96_i32_54 dim 1 : vector<8x128xf32>, i32 -> vector<8x128xf32>
    %c64_i32_55 = arith.constant 64 : i32
    %189 = tpu.dynamic_rotate %187 by %c64_i32_55 dim 1 : vector<8x128xf32>, i32 -> vector<8x128xf32>
    %c32_i32_56 = arith.constant 32 : i32
    %190 = tpu.dynamic_rotate %187 by %c32_i32_56 dim 1 : vector<8x128xf32>, i32 -> vector<8x128xf32>
    %191 = arith.mulf %188, %142 : vector<8x128xf32>
    %192 = arith.mulf %187, %189 : vector<8x128xf32>
    %193 = arith.addf %191, %192 : vector<8x128xf32>
    %194 = math.tanh %193 : vector<8x128xf32>
    %195 = arith.mulf %190, %194 : vector<8x128xf32>
    %196 = arith.mulf %195, %27 : vector<8x128xf32>
    %197 = vector.shape_cast %196 : vector<8x128xf32> to vector<1x8x128xf32>
    %cst_57 = arith.constant dense<0.000000e+00> : vector<1xf32>
    %198 = vector.multi_reduction <add>, %197, %cst_57 [1, 2] : vector<1x8x128xf32> to vector<1xf32>
    %199 = vector.shape_cast %198 : vector<1xf32> to vector<1x1x1xf32>
    %200 = vector.extract %199[0, 0, 0] : f32 from vector<1x1x1xf32>
    %201 = vector.broadcast %200 : f32 to vector<1x1xf32>
    %cst_58 = arith.constant 1.562500e-02 : f32
    %202 = vector.broadcast %cst_58 : f32 to vector<1x1xf32>
    %203 = arith.mulf %201, %202 : vector<1x1xf32>
    %204 = arith.mulf %196, %196 : vector<8x128xf32>
    %205 = vector.shape_cast %204 : vector<8x128xf32> to vector<1x8x128xf32>
    %cst_59 = arith.constant dense<0.000000e+00> : vector<1xf32>
    %206 = vector.multi_reduction <add>, %205, %cst_59 [1, 2] : vector<1x8x128xf32> to vector<1xf32>
    %207 = vector.shape_cast %206 : vector<1xf32> to vector<1x1x1xf32>
    %208 = vector.extract %207[0, 0, 0] : f32 from vector<1x1x1xf32>
    %209 = vector.broadcast %208 : f32 to vector<1x1xf32>
    %cst_60 = arith.constant 1.562500e-02 : f32
    %210 = vector.broadcast %cst_60 : f32 to vector<1x1xf32>
    %211 = arith.mulf %209, %210 : vector<1x1xf32>
    %212 = arith.mulf %203, %203 : vector<1x1xf32>
    %213 = arith.subf %211, %212 : vector<1x1xf32>
    %214 = vector.broadcast %203 : vector<1x1xf32> to vector<8x128xf32>
    %215 = arith.subf %195, %214 : vector<8x128xf32>
    %cst_61 = arith.constant 9.99999974E-6 : f32
    %216 = vector.broadcast %cst_61 : f32 to vector<1x1xf32>
    %217 = arith.addf %213, %216 : vector<1x1xf32>
    %218 = math.rsqrt %217 : vector<1x1xf32>
    %219 = vector.broadcast %218 : vector<1x1xf32> to vector<8x128xf32>
    %220 = arith.mulf %215, %219 : vector<8x128xf32>
    %c3 = arith.constant 3 : index
    %221 = memref.load %arg7[%c3] : memref<8xf32, #tpu.memory_space<smem>>
    %222 = vector.broadcast %221 : f32 to vector<8x128xf32>
    %223 = arith.mulf %220, %222 : vector<8x128xf32>
    %c3_62 = arith.constant 3 : index
    %224 = memref.load %arg8[%c3_62] : memref<8xf32, #tpu.memory_space<smem>>
    %225 = vector.broadcast %224 : f32 to vector<8x128xf32>
    %226 = arith.addf %223, %225 : vector<8x128xf32>
    %c0_63 = arith.constant 0 : index
    %c0_64 = arith.constant 0 : index
    %227 = vector.load %arg4[%c0_63, %c0_64] : memref<128x128xf32, #tpu.memory_space<vmem>>, vector<128x128xf32>
    %cst_65 = arith.constant dense<0.000000e+00> : vector<8x128xf32>
    %228 = tpu.matmul %226, %227, %cst_65 {dimension_numbers = #tpu.dot_dimension_numbers<[1], [0], [0], [1], [0, 0, 1, 1], [], []>} : vector<8x128xf32>, vector<128x128xf32>, vector<8x128xf32> -> vector<8x128xf32>
    %229 = vector.broadcast %28 : vector<1x128xf32> to vector<8x128xf32>
    %230 = arith.addf %228, %229 : vector<8x128xf32>
    %231 = vector.extract_strided_slice %5 {offsets = [32, 0], sizes = [8, 128], strides = [1, 1]} : vector<64x128xf32> to vector<8x128xf32>
    %232 = arith.truncf %195 : vector<8x128xf32> to vector<8x128xbf16>
    %cst_66 = arith.constant dense<0.000000e+00> : vector<8x128xf32>
    %233 = tpu.matmul %232, %6, %cst_66 {dimension_numbers = #tpu.dot_dimension_numbers<[1], [0], [0], [1], [0, 0, 1, 1], [], []>} : vector<8x128xbf16>, vector<128x128xbf16>, vector<8x128xf32> -> vector<8x128xf32>
    %234 = arith.addf %231, %233 : vector<8x128xf32>
    %235 = arith.mulf %234, %15 : vector<8x128xf32>
    %236 = math.tanh %235 : vector<8x128xf32>
    %237 = arith.mulf %236, %15 : vector<8x128xf32>
    %238 = arith.addf %237, %18 : vector<8x128xf32>
    %c96_i32_67 = arith.constant 96 : i32
    %239 = tpu.dynamic_rotate %238 by %c96_i32_67 dim 1 : vector<8x128xf32>, i32 -> vector<8x128xf32>
    %c64_i32_68 = arith.constant 64 : i32
    %240 = tpu.dynamic_rotate %238 by %c64_i32_68 dim 1 : vector<8x128xf32>, i32 -> vector<8x128xf32>
    %c32_i32_69 = arith.constant 32 : i32
    %241 = tpu.dynamic_rotate %238 by %c32_i32_69 dim 1 : vector<8x128xf32>, i32 -> vector<8x128xf32>
    %242 = arith.mulf %239, %193 : vector<8x128xf32>
    %243 = arith.mulf %238, %240 : vector<8x128xf32>
    %244 = arith.addf %242, %243 : vector<8x128xf32>
    %245 = math.tanh %244 : vector<8x128xf32>
    %246 = arith.mulf %241, %245 : vector<8x128xf32>
    %247 = arith.mulf %246, %27 : vector<8x128xf32>
    %248 = vector.shape_cast %247 : vector<8x128xf32> to vector<1x8x128xf32>
    %cst_70 = arith.constant dense<0.000000e+00> : vector<1xf32>
    %249 = vector.multi_reduction <add>, %248, %cst_70 [1, 2] : vector<1x8x128xf32> to vector<1xf32>
    %250 = vector.shape_cast %249 : vector<1xf32> to vector<1x1x1xf32>
    %251 = vector.extract %250[0, 0, 0] : f32 from vector<1x1x1xf32>
    %252 = vector.broadcast %251 : f32 to vector<1x1xf32>
    %cst_71 = arith.constant 1.562500e-02 : f32
    %253 = vector.broadcast %cst_71 : f32 to vector<1x1xf32>
    %254 = arith.mulf %252, %253 : vector<1x1xf32>
    %255 = arith.mulf %247, %247 : vector<8x128xf32>
    %256 = vector.shape_cast %255 : vector<8x128xf32> to vector<1x8x128xf32>
    %cst_72 = arith.constant dense<0.000000e+00> : vector<1xf32>
    %257 = vector.multi_reduction <add>, %256, %cst_72 [1, 2] : vector<1x8x128xf32> to vector<1xf32>
    %258 = vector.shape_cast %257 : vector<1xf32> to vector<1x1x1xf32>
    %259 = vector.extract %258[0, 0, 0] : f32 from vector<1x1x1xf32>
    %260 = vector.broadcast %259 : f32 to vector<1x1xf32>
    %cst_73 = arith.constant 1.562500e-02 : f32
    %261 = vector.broadcast %cst_73 : f32 to vector<1x1xf32>
    %262 = arith.mulf %260, %261 : vector<1x1xf32>
    %263 = arith.mulf %254, %254 : vector<1x1xf32>
    %264 = arith.subf %262, %263 : vector<1x1xf32>
    %265 = vector.broadcast %254 : vector<1x1xf32> to vector<8x128xf32>
    %266 = arith.subf %246, %265 : vector<8x128xf32>
    %cst_74 = arith.constant 9.99999974E-6 : f32
    %267 = vector.broadcast %cst_74 : f32 to vector<1x1xf32>
    %268 = arith.addf %264, %267 : vector<1x1xf32>
    %269 = math.rsqrt %268 : vector<1x1xf32>
    %270 = vector.broadcast %269 : vector<1x1xf32> to vector<8x128xf32>
    %271 = arith.mulf %266, %270 : vector<8x128xf32>
    %c4 = arith.constant 4 : index
    %272 = memref.load %arg7[%c4] : memref<8xf32, #tpu.memory_space<smem>>
    %273 = vector.broadcast %272 : f32 to vector<8x128xf32>
    %274 = arith.mulf %271, %273 : vector<8x128xf32>
    %c4_75 = arith.constant 4 : index
    %275 = memref.load %arg8[%c4_75] : memref<8xf32, #tpu.memory_space<smem>>
    %276 = vector.broadcast %275 : f32 to vector<8x128xf32>
    %277 = arith.addf %274, %276 : vector<8x128xf32>
    %c0_76 = arith.constant 0 : index
    %c0_77 = arith.constant 0 : index
    %278 = vector.load %arg4[%c0_76, %c0_77] : memref<128x128xf32, #tpu.memory_space<vmem>>, vector<128x128xf32>
    %cst_78 = arith.constant dense<0.000000e+00> : vector<8x128xf32>
    %279 = tpu.matmul %277, %278, %cst_78 {dimension_numbers = #tpu.dot_dimension_numbers<[1], [0], [0], [1], [0, 0, 1, 1], [], []>} : vector<8x128xf32>, vector<128x128xf32>, vector<8x128xf32> -> vector<8x128xf32>
    %280 = vector.broadcast %28 : vector<1x128xf32> to vector<8x128xf32>
    %281 = arith.addf %279, %280 : vector<8x128xf32>
    %282 = vector.extract_strided_slice %5 {offsets = [40, 0], sizes = [8, 128], strides = [1, 1]} : vector<64x128xf32> to vector<8x128xf32>
    %283 = arith.truncf %246 : vector<8x128xf32> to vector<8x128xbf16>
    %cst_79 = arith.constant dense<0.000000e+00> : vector<8x128xf32>
    %284 = tpu.matmul %283, %6, %cst_79 {dimension_numbers = #tpu.dot_dimension_numbers<[1], [0], [0], [1], [0, 0, 1, 1], [], []>} : vector<8x128xbf16>, vector<128x128xbf16>, vector<8x128xf32> -> vector<8x128xf32>
    %285 = arith.addf %282, %284 : vector<8x128xf32>
    %286 = arith.mulf %285, %15 : vector<8x128xf32>
    %287 = math.tanh %286 : vector<8x128xf32>
    %288 = arith.mulf %287, %15 : vector<8x128xf32>
    %289 = arith.addf %288, %18 : vector<8x128xf32>
    %c96_i32_80 = arith.constant 96 : i32
    %290 = tpu.dynamic_rotate %289 by %c96_i32_80 dim 1 : vector<8x128xf32>, i32 -> vector<8x128xf32>
    %c64_i32_81 = arith.constant 64 : i32
    %291 = tpu.dynamic_rotate %289 by %c64_i32_81 dim 1 : vector<8x128xf32>, i32 -> vector<8x128xf32>
    %c32_i32_82 = arith.constant 32 : i32
    %292 = tpu.dynamic_rotate %289 by %c32_i32_82 dim 1 : vector<8x128xf32>, i32 -> vector<8x128xf32>
    %293 = arith.mulf %290, %244 : vector<8x128xf32>
    %294 = arith.mulf %289, %291 : vector<8x128xf32>
    %295 = arith.addf %293, %294 : vector<8x128xf32>
    %296 = math.tanh %295 : vector<8x128xf32>
    %297 = arith.mulf %292, %296 : vector<8x128xf32>
    %298 = arith.mulf %297, %27 : vector<8x128xf32>
    %299 = vector.shape_cast %298 : vector<8x128xf32> to vector<1x8x128xf32>
    %cst_83 = arith.constant dense<0.000000e+00> : vector<1xf32>
    %300 = vector.multi_reduction <add>, %299, %cst_83 [1, 2] : vector<1x8x128xf32> to vector<1xf32>
    %301 = vector.shape_cast %300 : vector<1xf32> to vector<1x1x1xf32>
    %302 = vector.extract %301[0, 0, 0] : f32 from vector<1x1x1xf32>
    %303 = vector.broadcast %302 : f32 to vector<1x1xf32>
    %cst_84 = arith.constant 1.562500e-02 : f32
    %304 = vector.broadcast %cst_84 : f32 to vector<1x1xf32>
    %305 = arith.mulf %303, %304 : vector<1x1xf32>
    %306 = arith.mulf %298, %298 : vector<8x128xf32>
    %307 = vector.shape_cast %306 : vector<8x128xf32> to vector<1x8x128xf32>
    %cst_85 = arith.constant dense<0.000000e+00> : vector<1xf32>
    %308 = vector.multi_reduction <add>, %307, %cst_85 [1, 2] : vector<1x8x128xf32> to vector<1xf32>
    %309 = vector.shape_cast %308 : vector<1xf32> to vector<1x1x1xf32>
    %310 = vector.extract %309[0, 0, 0] : f32 from vector<1x1x1xf32>
    %311 = vector.broadcast %310 : f32 to vector<1x1xf32>
    %cst_86 = arith.constant 1.562500e-02 : f32
    %312 = vector.broadcast %cst_86 : f32 to vector<1x1xf32>
    %313 = arith.mulf %311, %312 : vector<1x1xf32>
    %314 = arith.mulf %305, %305 : vector<1x1xf32>
    %315 = arith.subf %313, %314 : vector<1x1xf32>
    %316 = vector.broadcast %305 : vector<1x1xf32> to vector<8x128xf32>
    %317 = arith.subf %297, %316 : vector<8x128xf32>
    %cst_87 = arith.constant 9.99999974E-6 : f32
    %318 = vector.broadcast %cst_87 : f32 to vector<1x1xf32>
    %319 = arith.addf %315, %318 : vector<1x1xf32>
    %320 = math.rsqrt %319 : vector<1x1xf32>
    %321 = vector.broadcast %320 : vector<1x1xf32> to vector<8x128xf32>
    %322 = arith.mulf %317, %321 : vector<8x128xf32>
    %c5 = arith.constant 5 : index
    %323 = memref.load %arg7[%c5] : memref<8xf32, #tpu.memory_space<smem>>
    %324 = vector.broadcast %323 : f32 to vector<8x128xf32>
    %325 = arith.mulf %322, %324 : vector<8x128xf32>
    %c5_88 = arith.constant 5 : index
    %326 = memref.load %arg8[%c5_88] : memref<8xf32, #tpu.memory_space<smem>>
    %327 = vector.broadcast %326 : f32 to vector<8x128xf32>
    %328 = arith.addf %325, %327 : vector<8x128xf32>
    %c0_89 = arith.constant 0 : index
    %c0_90 = arith.constant 0 : index
    %329 = vector.load %arg4[%c0_89, %c0_90] : memref<128x128xf32, #tpu.memory_space<vmem>>, vector<128x128xf32>
    %cst_91 = arith.constant dense<0.000000e+00> : vector<8x128xf32>
    %330 = tpu.matmul %328, %329, %cst_91 {dimension_numbers = #tpu.dot_dimension_numbers<[1], [0], [0], [1], [0, 0, 1, 1], [], []>} : vector<8x128xf32>, vector<128x128xf32>, vector<8x128xf32> -> vector<8x128xf32>
    %331 = vector.broadcast %28 : vector<1x128xf32> to vector<8x128xf32>
    %332 = arith.addf %330, %331 : vector<8x128xf32>
    %333 = vector.extract_strided_slice %5 {offsets = [48, 0], sizes = [8, 128], strides = [1, 1]} : vector<64x128xf32> to vector<8x128xf32>
    %334 = arith.truncf %297 : vector<8x128xf32> to vector<8x128xbf16>
    %cst_92 = arith.constant dense<0.000000e+00> : vector<8x128xf32>
    %335 = tpu.matmul %334, %6, %cst_92 {dimension_numbers = #tpu.dot_dimension_numbers<[1], [0], [0], [1], [0, 0, 1, 1], [], []>} : vector<8x128xbf16>, vector<128x128xbf16>, vector<8x128xf32> -> vector<8x128xf32>
    %336 = arith.addf %333, %335 : vector<8x128xf32>
    %337 = arith.mulf %336, %15 : vector<8x128xf32>
    %338 = math.tanh %337 : vector<8x128xf32>
    %339 = arith.mulf %338, %15 : vector<8x128xf32>
    %340 = arith.addf %339, %18 : vector<8x128xf32>
    %c96_i32_93 = arith.constant 96 : i32
    %341 = tpu.dynamic_rotate %340 by %c96_i32_93 dim 1 : vector<8x128xf32>, i32 -> vector<8x128xf32>
    %c64_i32_94 = arith.constant 64 : i32
    %342 = tpu.dynamic_rotate %340 by %c64_i32_94 dim 1 : vector<8x128xf32>, i32 -> vector<8x128xf32>
    %c32_i32_95 = arith.constant 32 : i32
    %343 = tpu.dynamic_rotate %340 by %c32_i32_95 dim 1 : vector<8x128xf32>, i32 -> vector<8x128xf32>
    %344 = arith.mulf %341, %295 : vector<8x128xf32>
    %345 = arith.mulf %340, %342 : vector<8x128xf32>
    %346 = arith.addf %344, %345 : vector<8x128xf32>
    %347 = math.tanh %346 : vector<8x128xf32>
    %348 = arith.mulf %343, %347 : vector<8x128xf32>
    %349 = arith.mulf %348, %27 : vector<8x128xf32>
    %350 = vector.shape_cast %349 : vector<8x128xf32> to vector<1x8x128xf32>
    %cst_96 = arith.constant dense<0.000000e+00> : vector<1xf32>
    %351 = vector.multi_reduction <add>, %350, %cst_96 [1, 2] : vector<1x8x128xf32> to vector<1xf32>
    %352 = vector.shape_cast %351 : vector<1xf32> to vector<1x1x1xf32>
    %353 = vector.extract %352[0, 0, 0] : f32 from vector<1x1x1xf32>
    %354 = vector.broadcast %353 : f32 to vector<1x1xf32>
    %cst_97 = arith.constant 1.562500e-02 : f32
    %355 = vector.broadcast %cst_97 : f32 to vector<1x1xf32>
    %356 = arith.mulf %354, %355 : vector<1x1xf32>
    %357 = arith.mulf %349, %349 : vector<8x128xf32>
    %358 = vector.shape_cast %357 : vector<8x128xf32> to vector<1x8x128xf32>
    %cst_98 = arith.constant dense<0.000000e+00> : vector<1xf32>
    %359 = vector.multi_reduction <add>, %358, %cst_98 [1, 2] : vector<1x8x128xf32> to vector<1xf32>
    %360 = vector.shape_cast %359 : vector<1xf32> to vector<1x1x1xf32>
    %361 = vector.extract %360[0, 0, 0] : f32 from vector<1x1x1xf32>
    %362 = vector.broadcast %361 : f32 to vector<1x1xf32>
    %cst_99 = arith.constant 1.562500e-02 : f32
    %363 = vector.broadcast %cst_99 : f32 to vector<1x1xf32>
    %364 = arith.mulf %362, %363 : vector<1x1xf32>
    %365 = arith.mulf %356, %356 : vector<1x1xf32>
    %366 = arith.subf %364, %365 : vector<1x1xf32>
    %367 = vector.broadcast %356 : vector<1x1xf32> to vector<8x128xf32>
    %368 = arith.subf %348, %367 : vector<8x128xf32>
    %cst_100 = arith.constant 9.99999974E-6 : f32
    %369 = vector.broadcast %cst_100 : f32 to vector<1x1xf32>
    %370 = arith.addf %366, %369 : vector<1x1xf32>
    %371 = math.rsqrt %370 : vector<1x1xf32>
    %372 = vector.broadcast %371 : vector<1x1xf32> to vector<8x128xf32>
    %373 = arith.mulf %368, %372 : vector<8x128xf32>
    %c6 = arith.constant 6 : index
    %374 = memref.load %arg7[%c6] : memref<8xf32, #tpu.memory_space<smem>>
    %375 = vector.broadcast %374 : f32 to vector<8x128xf32>
    %376 = arith.mulf %373, %375 : vector<8x128xf32>
    %c6_101 = arith.constant 6 : index
    %377 = memref.load %arg8[%c6_101] : memref<8xf32, #tpu.memory_space<smem>>
    %378 = vector.broadcast %377 : f32 to vector<8x128xf32>
    %379 = arith.addf %376, %378 : vector<8x128xf32>
    %c0_102 = arith.constant 0 : index
    %c0_103 = arith.constant 0 : index
    %380 = vector.load %arg4[%c0_102, %c0_103] : memref<128x128xf32, #tpu.memory_space<vmem>>, vector<128x128xf32>
    %cst_104 = arith.constant dense<0.000000e+00> : vector<8x128xf32>
    %381 = tpu.matmul %379, %380, %cst_104 {dimension_numbers = #tpu.dot_dimension_numbers<[1], [0], [0], [1], [0, 0, 1, 1], [], []>} : vector<8x128xf32>, vector<128x128xf32>, vector<8x128xf32> -> vector<8x128xf32>
    %382 = vector.broadcast %28 : vector<1x128xf32> to vector<8x128xf32>
    %383 = arith.addf %381, %382 : vector<8x128xf32>
    %384 = vector.extract_strided_slice %5 {offsets = [56, 0], sizes = [8, 128], strides = [1, 1]} : vector<64x128xf32> to vector<8x128xf32>
    %385 = arith.truncf %348 : vector<8x128xf32> to vector<8x128xbf16>
    %cst_105 = arith.constant dense<0.000000e+00> : vector<8x128xf32>
    %386 = tpu.matmul %385, %6, %cst_105 {dimension_numbers = #tpu.dot_dimension_numbers<[1], [0], [0], [1], [0, 0, 1, 1], [], []>} : vector<8x128xbf16>, vector<128x128xbf16>, vector<8x128xf32> -> vector<8x128xf32>
    %387 = arith.addf %384, %386 : vector<8x128xf32>
    %388 = arith.mulf %387, %15 : vector<8x128xf32>
    %389 = math.tanh %388 : vector<8x128xf32>
    %390 = arith.mulf %389, %15 : vector<8x128xf32>
    %391 = arith.addf %390, %18 : vector<8x128xf32>
    %c96_i32_106 = arith.constant 96 : i32
    %392 = tpu.dynamic_rotate %391 by %c96_i32_106 dim 1 : vector<8x128xf32>, i32 -> vector<8x128xf32>
    %c64_i32_107 = arith.constant 64 : i32
    %393 = tpu.dynamic_rotate %391 by %c64_i32_107 dim 1 : vector<8x128xf32>, i32 -> vector<8x128xf32>
    %c32_i32_108 = arith.constant 32 : i32
    %394 = tpu.dynamic_rotate %391 by %c32_i32_108 dim 1 : vector<8x128xf32>, i32 -> vector<8x128xf32>
    %395 = arith.mulf %392, %346 : vector<8x128xf32>
    %396 = arith.mulf %391, %393 : vector<8x128xf32>
    %397 = arith.addf %395, %396 : vector<8x128xf32>
    %398 = math.tanh %397 : vector<8x128xf32>
    %399 = arith.mulf %394, %398 : vector<8x128xf32>
    %400 = arith.mulf %399, %27 : vector<8x128xf32>
    %401 = vector.shape_cast %400 : vector<8x128xf32> to vector<1x8x128xf32>
    %cst_109 = arith.constant dense<0.000000e+00> : vector<1xf32>
    %402 = vector.multi_reduction <add>, %401, %cst_109 [1, 2] : vector<1x8x128xf32> to vector<1xf32>
    %403 = vector.shape_cast %402 : vector<1xf32> to vector<1x1x1xf32>
    %404 = vector.extract %403[0, 0, 0] : f32 from vector<1x1x1xf32>
    %405 = vector.broadcast %404 : f32 to vector<1x1xf32>
    %cst_110 = arith.constant 1.562500e-02 : f32
    %406 = vector.broadcast %cst_110 : f32 to vector<1x1xf32>
    %407 = arith.mulf %405, %406 : vector<1x1xf32>
    %408 = arith.mulf %400, %400 : vector<8x128xf32>
    %409 = vector.shape_cast %408 : vector<8x128xf32> to vector<1x8x128xf32>
    %cst_111 = arith.constant dense<0.000000e+00> : vector<1xf32>
    %410 = vector.multi_reduction <add>, %409, %cst_111 [1, 2] : vector<1x8x128xf32> to vector<1xf32>
    %411 = vector.shape_cast %410 : vector<1xf32> to vector<1x1x1xf32>
    %412 = vector.extract %411[0, 0, 0] : f32 from vector<1x1x1xf32>
    %413 = vector.broadcast %412 : f32 to vector<1x1xf32>
    %cst_112 = arith.constant 1.562500e-02 : f32
    %414 = vector.broadcast %cst_112 : f32 to vector<1x1xf32>
    %415 = arith.mulf %413, %414 : vector<1x1xf32>
    %416 = arith.mulf %407, %407 : vector<1x1xf32>
    %417 = arith.subf %415, %416 : vector<1x1xf32>
    %418 = vector.broadcast %407 : vector<1x1xf32> to vector<8x128xf32>
    %419 = arith.subf %399, %418 : vector<8x128xf32>
    %cst_113 = arith.constant 9.99999974E-6 : f32
    %420 = vector.broadcast %cst_113 : f32 to vector<1x1xf32>
    %421 = arith.addf %417, %420 : vector<1x1xf32>
    %422 = math.rsqrt %421 : vector<1x1xf32>
    %423 = vector.broadcast %422 : vector<1x1xf32> to vector<8x128xf32>
    %424 = arith.mulf %419, %423 : vector<8x128xf32>
    %c7 = arith.constant 7 : index
    %425 = memref.load %arg7[%c7] : memref<8xf32, #tpu.memory_space<smem>>
    %426 = vector.broadcast %425 : f32 to vector<8x128xf32>
    %427 = arith.mulf %424, %426 : vector<8x128xf32>
    %c7_114 = arith.constant 7 : index
    %428 = memref.load %arg8[%c7_114] : memref<8xf32, #tpu.memory_space<smem>>
    %429 = vector.broadcast %428 : f32 to vector<8x128xf32>
    %430 = arith.addf %427, %429 : vector<8x128xf32>
    %c0_115 = arith.constant 0 : index
    %c0_116 = arith.constant 0 : index
    %431 = vector.load %arg4[%c0_115, %c0_116] : memref<128x128xf32, #tpu.memory_space<vmem>>, vector<128x128xf32>
    %cst_117 = arith.constant dense<0.000000e+00> : vector<8x128xf32>
    %432 = tpu.matmul %430, %431, %cst_117 {dimension_numbers = #tpu.dot_dimension_numbers<[1], [0], [0], [1], [0, 0, 1, 1], [], []>} : vector<8x128xf32>, vector<128x128xf32>, vector<8x128xf32> -> vector<8x128xf32>
    %433 = vector.broadcast %28 : vector<1x128xf32> to vector<8x128xf32>
    %434 = arith.addf %432, %433 : vector<8x128xf32>
    %c0_118 = arith.constant 0 : index
    %c0_119 = arith.constant 0 : index
    %435 = vector.load %arg5[%c0_118, %c0_119] : memref<128x128xbf16, #tpu.memory_space<vmem>>, vector<128x128xbf16>
    %436 = tpu.iota {dimensions = array<i32: 1>} : vector<8x128xi32>
    %c64_i32_120 = arith.constant 64 : i32
    %437 = vector.broadcast %c64_i32_120 : i32 to vector<8x128xi32>
    %438 = arith.cmpi sge, %436, %437 : vector<8x128xi32>
    %c96_i32_121 = arith.constant 96 : i32
    %439 = vector.broadcast %c96_i32_121 : i32 to vector<8x128xi32>
    %440 = arith.cmpi slt, %436, %439 : vector<8x128xi32>
    %441 = arith.andi %438, %440 : vector<8x128xi1>
    %cst_122 = arith.constant 1.000000e+00 : f32
    %cst_123 = arith.constant 5.000000e-01 : f32
    %442 = vector.broadcast %cst_122 : f32 to vector<8x128xf32>
    %443 = vector.broadcast %cst_123 : f32 to vector<8x128xf32>
    %444 = arith.select %441, %442, %443 : vector<8x128xi1>, vector<8x128xf32>
    %cst_124 = arith.constant 0.000000e+00 : f32
    %cst_125 = arith.constant 5.000000e-01 : f32
    %445 = vector.broadcast %cst_124 : f32 to vector<8x128xf32>
    %446 = vector.broadcast %cst_125 : f32 to vector<8x128xf32>
    %447 = arith.select %441, %445, %446 : vector<8x128xi1>, vector<8x128xf32>
    %cst_126 = arith.constant 0.000000e+00 : f32
    %448 = vector.broadcast %cst_126 : f32 to vector<8x128xf32>
    %449 = arith.mulf %77, %444 : vector<8x128xf32>
    %450 = math.tanh %449 : vector<8x128xf32>
    %451 = arith.mulf %450, %444 : vector<8x128xf32>
    %452 = arith.addf %451, %447 : vector<8x128xf32>
    %c96_i32_127 = arith.constant 96 : i32
    %453 = tpu.dynamic_rotate %452 by %c96_i32_127 dim 1 : vector<8x128xf32>, i32 -> vector<8x128xf32>
    %c64_i32_128 = arith.constant 64 : i32
    %454 = tpu.dynamic_rotate %452 by %c64_i32_128 dim 1 : vector<8x128xf32>, i32 -> vector<8x128xf32>
    %c32_i32_129 = arith.constant 32 : i32
    %455 = tpu.dynamic_rotate %452 by %c32_i32_129 dim 1 : vector<8x128xf32>, i32 -> vector<8x128xf32>
    %456 = arith.mulf %453, %448 : vector<8x128xf32>
    %457 = arith.mulf %452, %454 : vector<8x128xf32>
    %458 = arith.addf %456, %457 : vector<8x128xf32>
    %459 = math.tanh %458 : vector<8x128xf32>
    %460 = arith.mulf %455, %459 : vector<8x128xf32>
    %461 = arith.truncf %460 : vector<8x128xf32> to vector<8x128xbf16>
    %cst_130 = arith.constant dense<0.000000e+00> : vector<8x128xf32>
    %462 = tpu.matmul %461, %435, %cst_130 {dimension_numbers = #tpu.dot_dimension_numbers<[1], [0], [0], [1], [0, 0, 1, 1], [], []>} : vector<8x128xbf16>, vector<128x128xbf16>, vector<8x128xf32> -> vector<8x128xf32>
    %463 = arith.addf %128, %462 : vector<8x128xf32>
    %464 = arith.mulf %463, %444 : vector<8x128xf32>
    %465 = math.tanh %464 : vector<8x128xf32>
    %466 = arith.mulf %465, %444 : vector<8x128xf32>
    %467 = arith.addf %466, %447 : vector<8x128xf32>
    %c96_i32_131 = arith.constant 96 : i32
    %468 = tpu.dynamic_rotate %467 by %c96_i32_131 dim 1 : vector<8x128xf32>, i32 -> vector<8x128xf32>
    %c64_i32_132 = arith.constant 64 : i32
    %469 = tpu.dynamic_rotate %467 by %c64_i32_132 dim 1 : vector<8x128xf32>, i32 -> vector<8x128xf32>
    %c32_i32_133 = arith.constant 32 : i32
    %470 = tpu.dynamic_rotate %467 by %c32_i32_133 dim 1 : vector<8x128xf32>, i32 -> vector<8x128xf32>
    %471 = arith.mulf %468, %458 : vector<8x128xf32>
    %472 = arith.mulf %467, %469 : vector<8x128xf32>
    %473 = arith.addf %471, %472 : vector<8x128xf32>
    %474 = math.tanh %473 : vector<8x128xf32>
    %475 = arith.mulf %470, %474 : vector<8x128xf32>
    %476 = arith.truncf %475 : vector<8x128xf32> to vector<8x128xbf16>
    %cst_134 = arith.constant dense<0.000000e+00> : vector<8x128xf32>
    %477 = tpu.matmul %476, %435, %cst_134 {dimension_numbers = #tpu.dot_dimension_numbers<[1], [0], [0], [1], [0, 0, 1, 1], [], []>} : vector<8x128xbf16>, vector<128x128xbf16>, vector<8x128xf32> -> vector<8x128xf32>
    %478 = arith.addf %179, %477 : vector<8x128xf32>
    %479 = arith.mulf %478, %444 : vector<8x128xf32>
    %480 = math.tanh %479 : vector<8x128xf32>
    %481 = arith.mulf %480, %444 : vector<8x128xf32>
    %482 = arith.addf %481, %447 : vector<8x128xf32>
    %c96_i32_135 = arith.constant 96 : i32
    %483 = tpu.dynamic_rotate %482 by %c96_i32_135 dim 1 : vector<8x128xf32>, i32 -> vector<8x128xf32>
    %c64_i32_136 = arith.constant 64 : i32
    %484 = tpu.dynamic_rotate %482 by %c64_i32_136 dim 1 : vector<8x128xf32>, i32 -> vector<8x128xf32>
    %c32_i32_137 = arith.constant 32 : i32
    %485 = tpu.dynamic_rotate %482 by %c32_i32_137 dim 1 : vector<8x128xf32>, i32 -> vector<8x128xf32>
    %486 = arith.mulf %483, %473 : vector<8x128xf32>
    %487 = arith.mulf %482, %484 : vector<8x128xf32>
    %488 = arith.addf %486, %487 : vector<8x128xf32>
    %489 = math.tanh %488 : vector<8x128xf32>
    %490 = arith.mulf %485, %489 : vector<8x128xf32>
    %491 = arith.truncf %490 : vector<8x128xf32> to vector<8x128xbf16>
    %cst_138 = arith.constant dense<0.000000e+00> : vector<8x128xf32>
    %492 = tpu.matmul %491, %435, %cst_138 {dimension_numbers = #tpu.dot_dimension_numbers<[1], [0], [0], [1], [0, 0, 1, 1], [], []>} : vector<8x128xbf16>, vector<128x128xbf16>, vector<8x128xf32> -> vector<8x128xf32>
    %493 = arith.addf %230, %492 : vector<8x128xf32>
    %494 = arith.mulf %493, %444 : vector<8x128xf32>
    %495 = math.tanh %494 : vector<8x128xf32>
    %496 = arith.mulf %495, %444 : vector<8x128xf32>
    %497 = arith.addf %496, %447 : vector<8x128xf32>
    %c96_i32_139 = arith.constant 96 : i32
    %498 = tpu.dynamic_rotate %497 by %c96_i32_139 dim 1 : vector<8x128xf32>, i32 -> vector<8x128xf32>
    %c64_i32_140 = arith.constant 64 : i32
    %499 = tpu.dynamic_rotate %497 by %c64_i32_140 dim 1 : vector<8x128xf32>, i32 -> vector<8x128xf32>
    %c32_i32_141 = arith.constant 32 : i32
    %500 = tpu.dynamic_rotate %497 by %c32_i32_141 dim 1 : vector<8x128xf32>, i32 -> vector<8x128xf32>
    %501 = arith.mulf %498, %488 : vector<8x128xf32>
    %502 = arith.mulf %497, %499 : vector<8x128xf32>
    %503 = arith.addf %501, %502 : vector<8x128xf32>
    %504 = math.tanh %503 : vector<8x128xf32>
    %505 = arith.mulf %500, %504 : vector<8x128xf32>
    %506 = arith.truncf %505 : vector<8x128xf32> to vector<8x128xbf16>
    %cst_142 = arith.constant dense<0.000000e+00> : vector<8x128xf32>
    %507 = tpu.matmul %506, %435, %cst_142 {dimension_numbers = #tpu.dot_dimension_numbers<[1], [0], [0], [1], [0, 0, 1, 1], [], []>} : vector<8x128xbf16>, vector<128x128xbf16>, vector<8x128xf32> -> vector<8x128xf32>
    %508 = arith.addf %281, %507 : vector<8x128xf32>
    %509 = arith.mulf %508, %444 : vector<8x128xf32>
    %510 = math.tanh %509 : vector<8x128xf32>
    %511 = arith.mulf %510, %444 : vector<8x128xf32>
    %512 = arith.addf %511, %447 : vector<8x128xf32>
    %c96_i32_143 = arith.constant 96 : i32
    %513 = tpu.dynamic_rotate %512 by %c96_i32_143 dim 1 : vector<8x128xf32>, i32 -> vector<8x128xf32>
    %c64_i32_144 = arith.constant 64 : i32
    %514 = tpu.dynamic_rotate %512 by %c64_i32_144 dim 1 : vector<8x128xf32>, i32 -> vector<8x128xf32>
    %c32_i32_145 = arith.constant 32 : i32
    %515 = tpu.dynamic_rotate %512 by %c32_i32_145 dim 1 : vector<8x128xf32>, i32 -> vector<8x128xf32>
    %516 = arith.mulf %513, %503 : vector<8x128xf32>
    %517 = arith.mulf %512, %514 : vector<8x128xf32>
    %518 = arith.addf %516, %517 : vector<8x128xf32>
    %519 = math.tanh %518 : vector<8x128xf32>
    %520 = arith.mulf %515, %519 : vector<8x128xf32>
    %521 = arith.truncf %520 : vector<8x128xf32> to vector<8x128xbf16>
    %cst_146 = arith.constant dense<0.000000e+00> : vector<8x128xf32>
    %522 = tpu.matmul %521, %435, %cst_146 {dimension_numbers = #tpu.dot_dimension_numbers<[1], [0], [0], [1], [0, 0, 1, 1], [], []>} : vector<8x128xbf16>, vector<128x128xbf16>, vector<8x128xf32> -> vector<8x128xf32>
    %523 = arith.addf %332, %522 : vector<8x128xf32>
    %524 = arith.mulf %523, %444 : vector<8x128xf32>
    %525 = math.tanh %524 : vector<8x128xf32>
    %526 = arith.mulf %525, %444 : vector<8x128xf32>
    %527 = arith.addf %526, %447 : vector<8x128xf32>
    %c96_i32_147 = arith.constant 96 : i32
    %528 = tpu.dynamic_rotate %527 by %c96_i32_147 dim 1 : vector<8x128xf32>, i32 -> vector<8x128xf32>
    %c64_i32_148 = arith.constant 64 : i32
    %529 = tpu.dynamic_rotate %527 by %c64_i32_148 dim 1 : vector<8x128xf32>, i32 -> vector<8x128xf32>
    %c32_i32_149 = arith.constant 32 : i32
    %530 = tpu.dynamic_rotate %527 by %c32_i32_149 dim 1 : vector<8x128xf32>, i32 -> vector<8x128xf32>
    %531 = arith.mulf %528, %518 : vector<8x128xf32>
    %532 = arith.mulf %527, %529 : vector<8x128xf32>
    %533 = arith.addf %531, %532 : vector<8x128xf32>
    %534 = math.tanh %533 : vector<8x128xf32>
    %535 = arith.mulf %530, %534 : vector<8x128xf32>
    %536 = arith.truncf %535 : vector<8x128xf32> to vector<8x128xbf16>
    %cst_150 = arith.constant dense<0.000000e+00> : vector<8x128xf32>
    %537 = tpu.matmul %536, %435, %cst_150 {dimension_numbers = #tpu.dot_dimension_numbers<[1], [0], [0], [1], [0, 0, 1, 1], [], []>} : vector<8x128xbf16>, vector<128x128xbf16>, vector<8x128xf32> -> vector<8x128xf32>
    %538 = arith.addf %383, %537 : vector<8x128xf32>
    %539 = arith.mulf %538, %444 : vector<8x128xf32>
    %540 = math.tanh %539 : vector<8x128xf32>
    %541 = arith.mulf %540, %444 : vector<8x128xf32>
    %542 = arith.addf %541, %447 : vector<8x128xf32>
    %c96_i32_151 = arith.constant 96 : i32
    %543 = tpu.dynamic_rotate %542 by %c96_i32_151 dim 1 : vector<8x128xf32>, i32 -> vector<8x128xf32>
    %c64_i32_152 = arith.constant 64 : i32
    %544 = tpu.dynamic_rotate %542 by %c64_i32_152 dim 1 : vector<8x128xf32>, i32 -> vector<8x128xf32>
    %c32_i32_153 = arith.constant 32 : i32
    %545 = tpu.dynamic_rotate %542 by %c32_i32_153 dim 1 : vector<8x128xf32>, i32 -> vector<8x128xf32>
    %546 = arith.mulf %543, %533 : vector<8x128xf32>
    %547 = arith.mulf %542, %544 : vector<8x128xf32>
    %548 = arith.addf %546, %547 : vector<8x128xf32>
    %549 = math.tanh %548 : vector<8x128xf32>
    %550 = arith.mulf %545, %549 : vector<8x128xf32>
    %551 = arith.truncf %550 : vector<8x128xf32> to vector<8x128xbf16>
    %cst_154 = arith.constant dense<0.000000e+00> : vector<8x128xf32>
    %552 = tpu.matmul %551, %435, %cst_154 {dimension_numbers = #tpu.dot_dimension_numbers<[1], [0], [0], [1], [0, 0, 1, 1], [], []>} : vector<8x128xbf16>, vector<128x128xbf16>, vector<8x128xf32> -> vector<8x128xf32>
    %553 = arith.addf %434, %552 : vector<8x128xf32>
    %554 = arith.mulf %553, %444 : vector<8x128xf32>
    %555 = math.tanh %554 : vector<8x128xf32>
    %556 = arith.mulf %555, %444 : vector<8x128xf32>
    %557 = arith.addf %556, %447 : vector<8x128xf32>
    %c96_i32_155 = arith.constant 96 : i32
    %558 = tpu.dynamic_rotate %557 by %c96_i32_155 dim 1 : vector<8x128xf32>, i32 -> vector<8x128xf32>
    %c64_i32_156 = arith.constant 64 : i32
    %559 = tpu.dynamic_rotate %557 by %c64_i32_156 dim 1 : vector<8x128xf32>, i32 -> vector<8x128xf32>
    %c32_i32_157 = arith.constant 32 : i32
    %560 = tpu.dynamic_rotate %557 by %c32_i32_157 dim 1 : vector<8x128xf32>, i32 -> vector<8x128xf32>
    %561 = arith.mulf %558, %548 : vector<8x128xf32>
    %562 = arith.mulf %557, %559 : vector<8x128xf32>
    %563 = arith.addf %561, %562 : vector<8x128xf32>
    %564 = math.tanh %563 : vector<8x128xf32>
    %565 = arith.mulf %560, %564 : vector<8x128xf32>
    %566 = tpu.iota {dimensions = array<i32: 0>} : vector<8x128xi32>
    %567 = tpu.iota {dimensions = array<i32: 1>} : vector<8x128xi32>
    %c2_i32_158 = arith.constant 2 : i32
    %568 = vector.broadcast %c2_i32_158 : i32 to vector<8x128xi32>
    %569 = arith.cmpi slt, %566, %568 : vector<8x128xi32>
    %c32_i32_159 = arith.constant 32 : i32
    %570 = vector.broadcast %c32_i32_159 : i32 to vector<8x128xi32>
    %571 = arith.cmpi slt, %567, %570 : vector<8x128xi32>
    %572 = arith.andi %569, %571 : vector<8x128xi1>
    %573 = arith.extui %572 : vector<8x128xi1> to vector<8x128xi32>
    %574 = arith.sitofp %573 : vector<8x128xi32> to vector<8x128xf32>
    %575 = arith.mulf %565, %574 : vector<8x128xf32>
    %576 = vector.shape_cast %575 : vector<8x128xf32> to vector<1x8x128xf32>
    %cst_160 = arith.constant dense<0.000000e+00> : vector<1xf32>
    %577 = vector.multi_reduction <add>, %576, %cst_160 [1, 2] : vector<1x8x128xf32> to vector<1xf32>
    %578 = vector.shape_cast %577 : vector<1xf32> to vector<1x1x1xf32>
    %579 = vector.extract %578[0, 0, 0] : f32 from vector<1x1x1xf32>
    %580 = vector.broadcast %579 : f32 to vector<1x1xf32>
    %cst_161 = arith.constant 1.562500e-02 : f32
    %581 = vector.broadcast %cst_161 : f32 to vector<1x1xf32>
    %582 = arith.mulf %580, %581 : vector<1x1xf32>
    %583 = arith.mulf %575, %575 : vector<8x128xf32>
    %584 = vector.shape_cast %583 : vector<8x128xf32> to vector<1x8x128xf32>
    %cst_162 = arith.constant dense<0.000000e+00> : vector<1xf32>
    %585 = vector.multi_reduction <add>, %584, %cst_162 [1, 2] : vector<1x8x128xf32> to vector<1xf32>
    %586 = vector.shape_cast %585 : vector<1xf32> to vector<1x1x1xf32>
    %587 = vector.extract %586[0, 0, 0] : f32 from vector<1x1x1xf32>
    %588 = vector.broadcast %587 : f32 to vector<1x1xf32>
    %cst_163 = arith.constant 1.562500e-02 : f32
    %589 = vector.broadcast %cst_163 : f32 to vector<1x1xf32>
    %590 = arith.mulf %588, %589 : vector<1x1xf32>
    %591 = arith.mulf %582, %582 : vector<1x1xf32>
    %592 = arith.subf %590, %591 : vector<1x1xf32>
    %593 = vector.broadcast %582 : vector<1x1xf32> to vector<8x128xf32>
    %594 = arith.subf %565, %593 : vector<8x128xf32>
    %cst_164 = arith.constant 9.99999974E-6 : f32
    %595 = vector.broadcast %cst_164 : f32 to vector<1x1xf32>
    %596 = arith.addf %592, %595 : vector<1x1xf32>
    %597 = math.rsqrt %596 : vector<1x1xf32>
    %598 = vector.broadcast %597 : vector<1x1xf32> to vector<8x128xf32>
    %599 = arith.mulf %594, %598 : vector<8x128xf32>
    %c7_165 = arith.constant 7 : index
    %600 = memref.load %arg7[%c7_165] : memref<8xf32, #tpu.memory_space<smem>>
    %601 = vector.broadcast %600 : f32 to vector<8x128xf32>
    %602 = arith.mulf %599, %601 : vector<8x128xf32>
    %c7_166 = arith.constant 7 : index
    %603 = memref.load %arg8[%c7_166] : memref<8xf32, #tpu.memory_space<smem>>
    %604 = vector.broadcast %603 : f32 to vector<8x128xf32>
    %605 = arith.addf %602, %604 : vector<8x128xf32>
    %c0_167 = arith.constant 0 : index
    %c0_168 = arith.constant 0 : index
    %606 = vector.load %arg9[%c0_167, %c0_168] : memref<128x16xf32, #tpu.memory_space<vmem>>, vector<128x16xf32>
    %cst_169 = arith.constant dense<0.000000e+00> : vector<8x16xf32>
    %607 = tpu.matmul %605, %606, %cst_169 {dimension_numbers = #tpu.dot_dimension_numbers<[1], [0], [0], [1], [0, 0, 1, 1], [], []>} : vector<8x128xf32>, vector<128x16xf32>, vector<8x16xf32> -> vector<8x16xf32>
    %c0_170 = arith.constant 0 : index
    %c0_171 = arith.constant 0 : index
    %608 = vector.load %arg10[%c0_170, %c0_171] : memref<1x16xf32, #tpu.memory_space<vmem>>, vector<1x16xf32>
    %609 = vector.broadcast %608 : vector<1x16xf32> to vector<8x16xf32>
    %610 = arith.addf %607, %609 : vector<8x16xf32>
    %cst_172 = arith.constant 0.000000e+00 : f32
    %611 = vector.broadcast %cst_172 : f32 to vector<8x16xf32>
    %612 = arith.maximumf %610, %611 : vector<8x16xf32>
    %c0_173 = arith.constant 0 : index
    %c0_174 = arith.constant 0 : index
    %613 = vector.load %arg11[%c0_173, %c0_174] : memref<16x2xf32, #tpu.memory_space<vmem>>, vector<16x2xf32>
    %cst_175 = arith.constant dense<0.000000e+00> : vector<8x2xf32>
    %614 = tpu.matmul %612, %613, %cst_175 {dimension_numbers = #tpu.dot_dimension_numbers<[1], [0], [0], [1], [0, 0, 1, 1], [], []>} : vector<8x16xf32>, vector<16x2xf32>, vector<8x2xf32> -> vector<8x2xf32>
    %c0_176 = arith.constant 0 : index
    %c0_177 = arith.constant 0 : index
    %615 = vector.load %arg12[%c0_176, %c0_177] : memref<1x2xf32, #tpu.memory_space<vmem>>, vector<1x2xf32>
    %616 = vector.broadcast %615 : vector<1x2xf32> to vector<8x2xf32>
    %617 = arith.addf %614, %616 : vector<8x2xf32>
    %cst_178 = arith.constant dense<0xFF800000> : vector<8xf32>
    %618 = vector.multi_reduction <maximumf>, %617, %cst_178 [1] : vector<8x2xf32> to vector<8xf32>
    %619 = vector.shape_cast %618 : vector<8xf32> to vector<8x1xf32>
    %620 = vector.broadcast %619 : vector<8x1xf32> to vector<8x2xf32>
    %621 = arith.subf %617, %620 : vector<8x2xf32>
    %622 = math.exp %621 : vector<8x2xf32>
    %cst_179 = arith.constant dense<0.000000e+00> : vector<8xf32>
    %623 = vector.multi_reduction <add>, %622, %cst_179 [1] : vector<8x2xf32> to vector<8xf32>
    %624 = vector.shape_cast %623 : vector<8xf32> to vector<8x1xf32>
    %625 = vector.broadcast %624 : vector<8x1xf32> to vector<8x2xf32>
    %626 = arith.divf %622, %625 : vector<8x2xf32>
    %c0_180 = arith.constant 0 : index
    %c0_181 = arith.constant 0 : index
    %627 = vector.load %arg13[%c0_180, %c0_181] : memref<8x2xf32, #tpu.memory_space<vmem>>, vector<8x2xf32>
    tpu.vector_store %arg13[%c0_180, %c0_181], %626 {strides = array<i32>} : memref<8x2xf32, #tpu.memory_space<vmem>>, vector<8x2xf32>,
    return
  }
}

</mosaic_0001>

<llo_original>
// kernel: tpu_custom_call.1
$region0: #{tpu_custom_call.1}
  #allocation0 [shape = 'u32[]', space=smem, size = 0x4, offset = 0x4, fixed_abs, tag = 'smem constant byte address 0x4 - core index']
  #allocation1 [shape = 'u32[72,128]{1,0:T(1,128)}', space=vmem, size = 0x9000, scoped, tag = 'internal scratch']
  %s0 = inlined_call_operand.vmem [shape: f32[64,8], index: 0, kind: input, shape index: {}]
  %s1 = inlined_call_operand.vmem [shape: f32[8,128], index: 1, kind: input, shape index: {}]
  %s2 = inlined_call_operand.vmem [shape: bf16[128,128], index: 2, kind: input, shape index: {}]
  %s3 = inlined_call_operand.vmem [shape: f32[1,128], index: 3, kind: input, shape index: {}]
  %s4 = inlined_call_operand.vmem [shape: f32[128,128], index: 4, kind: input, shape index: {}]
  %s5 = inlined_call_operand.hbm [shape: bf16[128,128], index: 5, kind: input, shape index: {}]
  %s6 = inlined_call_operand.vmem [shape: f32[1,128], index: 6, kind: input, shape index: {}]
  %s7 = inlined_call_operand.vmem [shape: f32[8], index: 7, kind: input, shape index: {}]
  %s8 = inlined_call_operand.vmem [shape: f32[8], index: 8, kind: input, shape index: {}]
  %s9 = inlined_call_operand.vmem [shape: f32[128,16], index: 9, kind: input, shape index: {}]
  %s10 = inlined_call_operand.vmem [shape: f32[1,16], index: 10, kind: input, shape index: {}]
  %s11 = inlined_call_operand.vmem [shape: f32[16,2], index: 11, kind: input, shape index: {}]
  %s12 = inlined_call_operand.vmem [shape: f32[1,2], index: 12, kind: input, shape index: {}]
  %s13 = inlined_call_operand.vmem [shape: f32[8,2], index: 13, kind: output, shape index: {}]
  %s14 = sld [smem:[#allocation0]]
  $region74: #{tpu_custom_call.1} parent=0
    _
  %s16 = ssub.s32 1, %s14
  %s17 = scalar_select 0, %s16, %s14
  $region1: #{tpu_custom_call.1} parent=0
    #allocation2 [shape = 'u8[32768]{0}', space=vmem, size = 0x8000, scoped, tag = 'input window, operand 5, single buffered']
    #allocation3 [shape = 's32[1]{0}', space=sflag, size = 0x4, scoped, tag = 'scoped memory for tpu_custom_call.1']
    #allocation4 [shape = 's32[1]{0}', space=sflag, size = 0x4, scoped, tag = 'scoped memory for tpu_custom_call.1']
    #allocation5 [shape = 'u8[512]{0}', space=smem, size = 0x200, scoped, tag = 'input window, operand 7, single buffered']
    #allocation6 [shape = 'u8[512]{0}', space=smem, size = 0x200, scoped, tag = 'input window, operand 8, single buffered']
    #allocation7 [shape = 's32[1]{0}', space=sflag, size = 0x4, scoped, tag = 'scoped memory for tpu_custom_call.1']
    %18 = vsyncpa [#allocation3], 0
    %19 = vsyncpa [#allocation4], 0
    %20 = vsyncpa [#allocation7], 0
    // Predicated region
    $region2: #{tpu_custom_call.1} parent=1 // pred_check
      _
    $region3: #{tpu_custom_call.1} parent=1 // pred_check_branch
      %22 = sbr.rel (0) target = $region5
    $region4: #{tpu_custom_call.1} parent=1 // pred_region
      _
    $region5: #{tpu_custom_call.1} parent=1 // pred_fallthru
      _
    // Predicated region
    $region6: #{tpu_custom_call.1} parent=1 // pred_check
      _
    $region7: #{tpu_custom_call.1} parent=1 // pred_check_branch
      %24 = sbr.rel (0) target = $region9
    $region8: #{tpu_custom_call.1} parent=1 // pred_region
      _
    $region9: #{tpu_custom_call.1} parent=1 // pred_fallthru
      _
    // Predicated region
    $region10: #{tpu_custom_call.1} parent=1 // pred_check
      _
    $region11: #{tpu_custom_call.1} parent=1 // pred_check_branch
      %26 = sbr.rel (0) target = $region13
    $region12: #{tpu_custom_call.1} parent=1 // pred_region
      _
    $region13: #{tpu_custom_call.1} parent=1 // pred_fallthru
      _
    // Predicated region
    $region14: #{tpu_custom_call.1} parent=1 // pred_check
      _
    $region15: #{tpu_custom_call.1} parent=1 // pred_check_branch
      %28 = sbr.rel (0) target = $region17
    $region16: #{tpu_custom_call.1} parent=1 // pred_region
      _
    $region17: #{tpu_custom_call.1} parent=1 // pred_fallthru
      _
    // Predicated region
    $region18: #{tpu_custom_call.1} parent=1 // pred_check
      _
    $region19: #{tpu_custom_call.1} parent=1 // pred_check_branch
      %30 = sbr.rel (0) target = $region21
    $region20: #{tpu_custom_call.1} parent=1 // pred_region
      _
    $region21: #{tpu_custom_call.1} parent=1 // pred_fallthru
      _
    // Predicated region
    $region22: #{tpu_custom_call.1} parent=1 // pred_check
      _
    $region23: #{tpu_custom_call.1} parent=1 // pred_check_branch
      %32 = sbr.rel (0) target = $region25
    $region24: #{tpu_custom_call.1} parent=1 // pred_region
      %34 = vsyncadd [#allocation3], 0
      %s35 = sshll.u32 %s5, 4
      %s36 = int_to_ptr.hbm [resolvable:$true] %s35
      %s37 = sshll.u32 [#allocation2], 4
      %s38 = int_to_ptr.vmem [resolvable:$true] %s37
      %43 = dma.hbm_to_vmem [thread:$0]  %s36, 1024, %s38, [#allocation3], 64, 64, 4
    $region25: #{tpu_custom_call.1} parent=1 // pred_fallthru
      _
    // Predicated region
    $region26: #{tpu_custom_call.1} parent=1 // pred_check
      _
    $region27: #{tpu_custom_call.1} parent=1 // pred_check_branch
      %45 = sbr.rel (0) target = $region29
    $region28: #{tpu_custom_call.1} parent=1 // pred_region
      _
    $region29: #{tpu_custom_call.1} parent=1 // pred_fallthru
      _
    // Predicated region
    $region30: #{tpu_custom_call.1} parent=1 // pred_check
      _
    $region31: #{tpu_custom_call.1} parent=1 // pred_check_branch
      %47 = sbr.rel (0) target = $region33
    $region32: #{tpu_custom_call.1} parent=1 // pred_region
      %49 = vsyncadd [#allocation4], 0
      %s51 = sshll.u32 %s7, 4
      %s52 = int_to_ptr.vmem [resolvable:$true] %s51
      %54 = dma.vmem_to_smem %s52, 16, [#allocation5], [#allocation4]
    $region33: #{tpu_custom_call.1} parent=1 // pred_fallthru
      _
    // Predicated region
    $region34: #{tpu_custom_call.1} parent=1 // pred_check
      _
    $region35: #{tpu_custom_call.1} parent=1 // pred_check_branch
      %56 = sbr.rel (0) target = $region37
    $region36: #{tpu_custom_call.1} parent=1 // pred_region
      %58 = vsyncadd [#allocation7], 0
      %s60 = sshll.u32 %s8, 4
      %s61 = int_to_ptr.vmem [resolvable:$true] %s60
      %63 = dma.vmem_to_smem %s61, 16, [#allocation6], [#allocation7]
    $region37: #{tpu_custom_call.1} parent=1 // pred_fallthru
      _
    // Predicated region
    $region38: #{tpu_custom_call.1} parent=1 // pred_check
      _
    $region39: #{tpu_custom_call.1} parent=1 // pred_check_branch
      %65 = sbr.rel (0) target = $region41
    $region40: #{tpu_custom_call.1} parent=1 // pred_region
      _
    $region41: #{tpu_custom_call.1} parent=1 // pred_fallthru
      _
    // Predicated region
    $region42: #{tpu_custom_call.1} parent=1 // pred_check
      _
    $region43: #{tpu_custom_call.1} parent=1 // pred_check_branch
      %67 = sbr.rel (0) target = $region45
    $region44: #{tpu_custom_call.1} parent=1 // pred_region
      _
    $region45: #{tpu_custom_call.1} parent=1 // pred_fallthru
      _
    // Predicated region
    $region46: #{tpu_custom_call.1} parent=1 // pred_check
      _
    $region47: #{tpu_custom_call.1} parent=1 // pred_check_branch
      %69 = sbr.rel (0) target = $region49
    $region48: #{tpu_custom_call.1} parent=1 // pred_region
      _
    $region49: #{tpu_custom_call.1} parent=1 // pred_fallthru
      _
    // Predicated region
    $region50: #{tpu_custom_call.1} parent=1 // pred_check
      _
    $region51: #{tpu_custom_call.1} parent=1 // pred_check_branch
      %71 = sbr.rel (0) target = $region53
    $region52: #{tpu_custom_call.1} parent=1 // pred_region
      _
    $region53: #{tpu_custom_call.1} parent=1 // pred_fallthru
      _
    // Predicated region
    $region54: #{tpu_custom_call.1} parent=1 // pred_check
      _
    $region55: #{tpu_custom_call.1} parent=1 // pred_check_branch
      %73 = sbr.rel (0) target = $region57
    $region56: #{tpu_custom_call.1} parent=1 // pred_region
      %75 = dma.done [#allocation3], 1024
    $region57: #{tpu_custom_call.1} parent=1 // pred_fallthru
      _
    // Predicated region
    $region58: #{tpu_custom_call.1} parent=1 // pred_check
      _
    $region59: #{tpu_custom_call.1} parent=1 // pred_check_branch
      %77 = sbr.rel (0) target = $region61
    $region60: #{tpu_custom_call.1} parent=1 // pred_region
      %79 = dma.done [#allocation4], 16
    $region61: #{tpu_custom_call.1} parent=1 // pred_fallthru
      _
    // Predicated region
    $region62: #{tpu_custom_call.1} parent=1 // pred_check
      _
    $region63: #{tpu_custom_call.1} parent=1 // pred_check_branch
      %81 = sbr.rel (0) target = $region65
    $region64: #{tpu_custom_call.1} parent=1 // pred_region
      %83 = dma.done [#allocation7], 16
    $region65: #{tpu_custom_call.1} parent=1 // pred_fallthru
      _
    %84 = sfence
    %v85 = vld [vmem:[%s0] sm:$0xff]
    %v86 = vld [vmem:[%s0 + $0x8] sm:$0xff]
    %v87 = vld [vmem:[%s0 + $0x10] sm:$0xff]
    %v88 = vld [vmem:[%s0 + $0x18] sm:$0xff]
    %v89 = vld [vmem:[%s0 + $0x20] sm:$0xff]
    %v90 = vld [vmem:[%s0 + $0x28] sm:$0xff]
    %v91 = vld [vmem:[%s0 + $0x30] sm:$0xff]
    %v92 = vld [vmem:[%s0 + $0x38] sm:$0xff]
    %v93 = vld [vmem:[%s1] sm:$0xff]
    %v94 = vld [vmem:[%s3] sm:$0x1]
    %v96 = vperm.slane %v94, 0
    %vm98 = vcmask 64512
    %v100 = vsel %vm98, %v85, 0
    %v103 = vsel %vm98, %v86, 0
    %v106 = vsel %vm98, %v87, 0
    %v109 = vsel %vm98, %v88, 0
    %v112 = vsel %vm98, %v89, 0
    %v115 = vsel %vm98, %v90, 0
    %v118 = vsel %vm98, %v91, 0
    %v121 = vsel %vm98, %v92, 0
    %123 = vmatpush.msra.mxu0 0.0
    %124 = vmatpush.msra.mxu0 0.0
    %125 = vmatpush.msra.mxu0 0.0
    %126 = vmatpush.msra.mxu0 0.0
    %127 = vmatpush.msra.mxu0 0.0
    %128 = vmatpush.msra.mxu0 0.0
    %129 = vmatpush.msra.mxu0 0.0
    %130 = vmatpush.msra.mxu0 0.0
    %131 = vmatpush.msra.mxu0 0.0
    %132 = vmatpush.msra.mxu0 0.0
    %133 = vmatpush.msra.mxu0 0.0
    %134 = vmatpush.msra.mxu0 0.0
    %135 = vmatpush.msra.mxu0 0.0
    %136 = vmatpush.msra.mxu0 0.0
    %137 = vmatpush.msra.mxu0 0.0
    %138 = vmatpush.msra.mxu0 %v93
    %139 = vmatmul.f32.gmra.mxu0 %v100
    %v140 = vpop.f32.mrf.mxu0
    %v141 = vadd.f32 %v96, %v140
    %142 = vmatmul.f32.gmra.mxu0 %v103
    %v143 = vpop.f32.mrf.mxu0
    %v144 = vadd.f32 %v96, %v143
    %145 = vmatmul.f32.gmra.mxu0 %v106
    %v146 = vpop.f32.mrf.mxu0
    %v147 = vadd.f32 %v96, %v146
    %148 = vmatmul.f32.gmra.mxu0 %v109
    %v149 = vpop.f32.mrf.mxu0
    %v150 = vadd.f32 %v96, %v149
    %151 = vmatmul.f32.gmra.mxu0 %v112
    %v152 = vpop.f32.mrf.mxu0
    %v153 = vadd.f32 %v96, %v152
    %154 = vmatmul.f32.gmra.mxu0 %v115
    %v155 = vpop.f32.mrf.mxu0
    %v156 = vadd.f32 %v96, %v155
    %157 = vmatmul.f32.gmra.mxu0 %v118
    %v158 = vpop.f32.mrf.mxu0
    %v159 = vadd.f32 %v96, %v158
    %160 = vmatmul.f32.gmra.mxu0 %v121
    %v161 = vpop.f32.mrf.mxu0
    %v162 = vadd.f32 %v96, %v161
    %163 = vdwg.mxu0
    %v164 = vld [vmem:[%s2] sm:$0xf]
    %v165 = vld [vmem:[%s2 + $0x4] sm:$0xf]
    %v166 = vld [vmem:[%s2 + $0x8] sm:$0xf]
    %v167 = vld [vmem:[%s2 + $0xc] sm:$0xf]
    %v168 = vld [vmem:[%s2 + $0x10] sm:$0xf]
    %v169 = vld [vmem:[%s2 + $0x14] sm:$0xf]
    %v170 = vld [vmem:[%s2 + $0x18] sm:$0xf]
    %v171 = vld [vmem:[%s2 + $0x1c] sm:$0xf]
    %v172 = vld [vmem:[%s2 + $0x20] sm:$0xf]
    %v173 = vld [vmem:[%s2 + $0x24] sm:$0xf]
    %v174 = vld [vmem:[%s2 + $0x28] sm:$0xf]
    %v175 = vld [vmem:[%s2 + $0x2c] sm:$0xf]
    %v176 = vld [vmem:[%s2 + $0x30] sm:$0xf]
    %v177 = vld [vmem:[%s2 + $0x34] sm:$0xf]
    %v178 = vld [vmem:[%s2 + $0x38] sm:$0xf]
    %v179 = vld [vmem:[%s2 + $0x3c] sm:$0xf]
    %v180 = vlaneseq
    %v181 = vand.u32 %v180, 127
    %vm182 = vcmp.ge.s32.totalorder %v181, 64
    %vm183 = vcmp.lt.s32.totalorder %v181, 96
    %vm184 = vmand %vm182, %vm183
    %v185 = vsel %vm184, 1.0, 0.5
    %v186 = vsel %vm184, 0.0, 0.5
    %v187 = vlaneseq
    %v188 = vshrl.u32 %v187, 7
    %vm189 = vcmp.lt.s32.totalorder %v188, 2
    %vm190 = vcmp.lt.s32.totalorder %v181, 32
    %vm191 = vmand %vm189, %vm190
    %v192 = vsel %vm191, 1, 0
    %v193 = vcvt.s32.f32 %v192
    %v194 = vld [vmem:[%s6] sm:$0x1]
    %v195 = vmul.f32 %v141, %v185
    %v196 = vtanh.pop %v195
    %v197 = vmul.f32 %v196, %v185
    %v198 = vadd.f32 %v197, %v186
    %199 = vrot.lane.b32.xlu0 %v198, 96
    %v200 = vpop.permute.xlu0 %199
    %201 = vrot.lane.b32.xlu0 %v198, 64
    %v202 = vpop.permute.xlu0 %201
    %203 = vrot.lane.b32.xlu0 %v198, 32
    %v204 = vpop.permute.xlu0 %203
    %v205 = vmul.f32 %v200, 0.0
    %v206 = vmul.f32 %v198, %v202
    %v207 = vadd.f32 %v205, %v206
    %v208 = vtanh.pop %v207
    %v209 = vmul.f32 %v204, %v208
    %v210 = vmul.f32 %v209, %v193
    %211 = vadd.xlane.f32.xlu0 %v210
    %v212 = vpop.xlane.xlu0 %211
    %v213 = vrot.slane %v212, 4
    %v214 = vadd.f32 %v212, %v213
    %v215 = vrot.slane %v214, 2
    %v216 = vadd.f32 %v214, %v215
    %v217 = vrot.slane %v216, 1
    %v218 = vadd.f32 %v216, %v217
    %s219 = vtos %v218
    %v220 = vstv %s219
    %v221 = vmul.f32 %v220, 0.015625
    %v222 = vmul.f32 %v210, %v210
    %223 = vadd.xlane.f32.xlu0 %v222
    %v224 = vpop.xlane.xlu0 %223
    %v225 = vrot.slane %v224, 4
    %v226 = vadd.f32 %v224, %v225
    %v227 = vrot.slane %v226, 2
    %v228 = vadd.f32 %v226, %v227
    %v229 = vrot.slane %v228, 1
    %v230 = vadd.f32 %v228, %v229
    %s231 = vtos %v230
    %v232 = vstv %s231
    %v233 = vmul.f32 %v232, 0.015625
    %v234 = vmul.f32 %v221, %v221
    %v235 = vsub.f32 %v233, %v234
    %v236 = vsub.f32 %v209, %v221
    %v237 = vadd.f32 %v235, 1e-05
    %v238 = vrsqrt.pop %v237
    %v239 = vmul.f32 %v238, %v237
    %v240 = vmul.f32 %v239, %v238
    %v241 = vmul.f32 0.5, %v240
    %v242 = vsub.f32 1.5, %v241
    %v243 = vmul.f32 %v238, %v242
    %vm244 = vweird.f32 %v237
    %vm245 = vweird.f32 %v238
    %vm246 = vmor %vm244, %vm245
    %v247 = vsel %vm246, %v238, %v243
    %v248 = vmul.f32 %v236, %v247
    %s249 = sld [smem:[#allocation5]]
    %v250 = vstv %s249
    %v251 = vmul.f32 %v248, %v250
    %s252 = sld [smem:[#allocation6]]
    %v253 = vstv %s252
    %v254 = vadd.f32 %v251, %v253
    %v255 = vld [vmem:[%s4] sm:$0xff]
    %v256 = vld [vmem:[%s4 + $0x8] sm:$0xff]
    %v257 = vld [vmem:[%s4 + $0x10] sm:$0xff]
    %v258 = vld [vmem:[%s4 + $0x18] sm:$0xff]
    %v259 = vld [vmem:[%s4 + $0x20] sm:$0xff]
    %v260 = vld [vmem:[%s4 + $0x28] sm:$0xff]
    %v261 = vld [vmem:[%s4 + $0x30] sm:$0xff]
    %v262 = vld [vmem:[%s4 + $0x38] sm:$0xff]
    %v263 = vld [vmem:[%s4 + $0x40] sm:$0xff]
    %v264 = vld [vmem:[%s4 + $0x48] sm:$0xff]
    %v265 = vld [vmem:[%s4 + $0x50] sm:$0xff]
    %v266 = vld [vmem:[%s4 + $0x58] sm:$0xff]
    %v267 = vld [vmem:[%s4 + $0x60] sm:$0xff]
    %v268 = vld [vmem:[%s4 + $0x68] sm:$0xff]
    %v269 = vld [vmem:[%s4 + $0x70] sm:$0xff]
    %v270 = vld [vmem:[%s4 + $0x78] sm:$0xff]
    %v272 = vperm.slane %v194, 0
    %274 = vmatpush.msra.mxu0 %v270
    %275 = vmatpush.msra.mxu0 %v269
    %276 = vmatpush.msra.mxu0 %v268
    %277 = vmatpush.msra.mxu0 %v267
    %278 = vmatpush.msra.mxu0 %v266
    %279 = vmatpush.msra.mxu0 %v265
    %280 = vmatpush.msra.mxu0 %v264
    %281 = vmatpush.msra.mxu0 %v263
    %282 = vmatpush.msra.mxu0 %v262
    %283 = vmatpush.msra.mxu0 %v261
    %284 = vmatpush.msra.mxu0 %v260
    %285 = vmatpush.msra.mxu0 %v259
    %286 = vmatpush.msra.mxu0 %v258
    %287 = vmatpush.msra.mxu0 %v257
    %288 = vmatpush.msra.mxu0 %v256
    %289 = vmatpush.msra.mxu0 %v255
    %290 = vmatmul.f32.gmra.mxu0 %v254
    %v291 = vpop.f32.mrf.mxu0
    %v292 = vadd.f32 %v272, %v291
    %293 = vdwg.mxu0
    %v294 = vpack.c.bf16 %v209, %v209
    %v311 = vunpack.c.l.b16 %v164
    %v312 = vunpack.c.l.b16 %v165
    %v313 = vunpack.c.l.b16 %v166
    %v314 = vunpack.c.l.b16 %v167
    %v315 = vunpack.c.l.b16 %v168
    %v316 = vunpack.c.l.b16 %v169
    %v317 = vunpack.c.l.b16 %v170
    %v318 = vunpack.c.l.b16 %v171
    %v319 = vunpack.c.l.b16 %v172
    %v320 = vunpack.c.l.b16 %v173
    %v321 = vunpack.c.l.b16 %v174
    %v322 = vunpack.c.l.b16 %v175
    %v323 = vunpack.c.l.b16 %v176
    %v324 = vunpack.c.l.b16 %v177
    %v325 = vunpack.c.l.b16 %v178
    %v326 = vunpack.c.l.b16 %v179
    %v327 = vpack.c.b16 %v312, %v311
    %v328 = vpack.c.b16 %v314, %v313
    %v329 = vpack.c.b16 %v316, %v315
    %v330 = vpack.c.b16 %v318, %v317
    %v331 = vpack.c.b16 %v320, %v319
    %v332 = vpack.c.b16 %v322, %v321
    %v333 = vpack.c.b16 %v324, %v323
    %v334 = vpack.c.b16 %v326, %v325
    %343 = vmatpush.bf16.msra.mxu0 %v334
    %344 = vmatpush.bf16.msra.mxu0 %v333
    %345 = vmatpush.bf16.msra.mxu0 %v332
    %346 = vmatpush.bf16.msra.mxu0 %v331
    %347 = vmatpush.bf16.msra.mxu0 %v330
    %348 = vmatpush.bf16.msra.mxu0 %v329
    %349 = vmatpush.bf16.msra.mxu0 %v328
    %350 = vmatpush.bf16.msra.mxu0 %v327
    %351 = vmatmul.bf16.gmra.mxu0 %v294
    %v352 = vpop.f32.mrf.mxu0
    %v353 = vadd.f32 0.0, %v352
    %v354 = vpop.f32.mrf.mxu0
    %355 = vdwg.mxu0
    %v356 = vadd.f32 %v144, %v353
    %v357 = vmul.f32 %v356, %v185
    %v358 = vtanh.pop %v357
    %v359 = vmul.f32 %v358, %v185
    %v360 = vadd.f32 %v359, %v186
    %361 = vrot.lane.b32.xlu0 %v360, 96
    %v362 = vpop.permute.xlu0 %361
    %363 = vrot.lane.b32.xlu0 %v360, 64
    %v364 = vpop.permute.xlu0 %363
    %365 = vrot.lane.b32.xlu0 %v360, 32
    %v366 = vpop.permute.xlu0 %365
    %v367 = vmul.f32 %v362, %v207
    %v368 = vmul.f32 %v360, %v364
    %v369 = vadd.f32 %v367, %v368
    %v370 = vtanh.pop %v369
    %v371 = vmul.f32 %v366, %v370
    %v372 = vmul.f32 %v371, %v193
    %373 = vadd.xlane.f32.xlu0 %v372
    %v374 = vpop.xlane.xlu0 %373
    %v375 = vrot.slane %v374, 4
    %v376 = vadd.f32 %v374, %v375
    %v377 = vrot.slane %v376, 2
    %v378 = vadd.f32 %v376, %v377
    %v379 = vrot.slane %v378, 1
    %v380 = vadd.f32 %v378, %v379
    %s381 = vtos %v380
    %v382 = vstv %s381
    %v383 = vmul.f32 %v382, 0.015625
    %v384 = vmul.f32 %v372, %v372
    %385 = vadd.xlane.f32.xlu0 %v384
    %v386 = vpop.xlane.xlu0 %385
    %v387 = vrot.slane %v386, 4
    %v388 = vadd.f32 %v386, %v387
    %v389 = vrot.slane %v388, 2
    %v390 = vadd.f32 %v388, %v389
    %v391 = vrot.slane %v390, 1
    %v392 = vadd.f32 %v390, %v391
    %s393 = vtos %v392
    %v394 = vstv %s393
    %v395 = vmul.f32 %v394, 0.015625
    %v396 = vmul.f32 %v383, %v383
    %v397 = vsub.f32 %v395, %v396
    %v398 = vsub.f32 %v371, %v383
    %v399 = vadd.f32 %v397, 1e-05
    %v400 = vrsqrt.pop %v399
    %v401 = vmul.f32 %v400, %v399
    %v402 = vmul.f32 %v401, %v400
    %v403 = vmul.f32 0.5, %v402
    %v404 = vsub.f32 1.5, %v403
    %v405 = vmul.f32 %v400, %v404
    %vm406 = vweird.f32 %v399
    %vm407 = vweird.f32 %v400
    %vm408 = vmor %vm406, %vm407
    %v409 = vsel %vm408, %v400, %v405
    %v410 = vmul.f32 %v398, %v409
    %s411 = sld [smem:[#allocation5 + $0x1]]
    %v412 = vstv %s411
    %v413 = vmul.f32 %v410, %v412
    %s414 = sld [smem:[#allocation6 + $0x1]]
    %v415 = vstv %s414
    %v416 = vadd.f32 %v413, %v415
    %417 = vmatpush.msra.mxu0 %v270
    %418 = vmatpush.msra.mxu0 %v269
    %419 = vmatpush.msra.mxu0 %v268
    %420 = vmatpush.msra.mxu0 %v267
    %421 = vmatpush.msra.mxu0 %v266
    %422 = vmatpush.msra.mxu0 %v265
    %423 = vmatpush.msra.mxu0 %v264
    %424 = vmatpush.msra.mxu0 %v263
    %425 = vmatpush.msra.mxu0 %v262
    %426 = vmatpush.msra.mxu0 %v261
    %427 = vmatpush.msra.mxu0 %v260
    %428 = vmatpush.msra.mxu0 %v259
    %429 = vmatpush.msra.mxu0 %v258
    %430 = vmatpush.msra.mxu0 %v257
    %431 = vmatpush.msra.mxu0 %v256
    %432 = vmatpush.msra.mxu0 %v255
    %433 = vmatmul.f32.gmra.mxu0 %v416
    %v434 = vpop.f32.mrf.mxu0
    %v435 = vadd.f32 %v272, %v434
    %436 = vdwg.mxu0
    %v437 = vpack.c.bf16 %v371, %v371
    %438 = vmatpush.bf16.msra.mxu0 %v334
    %439 = vmatpush.bf16.msra.mxu0 %v333
    %440 = vmatpush.bf16.msra.mxu0 %v332
    %441 = vmatpush.bf16.msra.mxu0 %v331
    %442 = vmatpush.bf16.msra.mxu0 %v330
    %443 = vmatpush.bf16.msra.mxu0 %v329
    %444 = vmatpush.bf16.msra.mxu0 %v328
    %445 = vmatpush.bf16.msra.mxu0 %v327
    %446 = vmatmul.bf16.gmra.mxu0 %v437
    %v447 = vpop.f32.mrf.mxu0
    %v448 = vadd.f32 0.0, %v447
    %v449 = vpop.f32.mrf.mxu0
    %450 = vdwg.mxu0
    %v451 = vadd.f32 %v147, %v448
    %v452 = vmul.f32 %v451, %v185
    %v453 = vtanh.pop %v452
    %v454 = vmul.f32 %v453, %v185
    %v455 = vadd.f32 %v454, %v186
    %456 = vrot.lane.b32.xlu0 %v455, 96
    %v457 = vpop.permute.xlu0 %456
    %458 = vrot.lane.b32.xlu0 %v455, 64
    %v459 = vpop.permute.xlu0 %458
    %460 = vrot.lane.b32.xlu0 %v455, 32
    %v461 = vpop.permute.xlu0 %460
    %v462 = vmul.f32 %v457, %v369
    %v463 = vmul.f32 %v455, %v459
    %v464 = vadd.f32 %v462, %v463
    %v465 = vtanh.pop %v464
    %v466 = vmul.f32 %v461, %v465
    %v467 = vmul.f32 %v466, %v193
    %468 = vadd.xlane.f32.xlu0 %v467
    %v469 = vpop.xlane.xlu0 %468
    %v470 = vrot.slane %v469, 4
    %v471 = vadd.f32 %v469, %v470
    %v472 = vrot.slane %v471, 2
    %v473 = vadd.f32 %v471, %v472
    %v474 = vrot.slane %v473, 1
    %v475 = vadd.f32 %v473, %v474
    %s476 = vtos %v475
    %v477 = vstv %s476
    %v478 = vmul.f32 %v477, 0.015625
    %v479 = vmul.f32 %v467, %v467
    %480 = vadd.xlane.f32.xlu0 %v479
    %v481 = vpop.xlane.xlu0 %480
    %v482 = vrot.slane %v481, 4
    %v483 = vadd.f32 %v481, %v482
    %v484 = vrot.slane %v483, 2
    %v485 = vadd.f32 %v483, %v484
    %v486 = vrot.slane %v485, 1
    %v487 = vadd.f32 %v485, %v486
    %s488 = vtos %v487
    %v489 = vstv %s488
    %v490 = vmul.f32 %v489, 0.015625
    %v491 = vmul.f32 %v478, %v478
    %v492 = vsub.f32 %v490, %v491
    %v493 = vsub.f32 %v466, %v478
    %v494 = vadd.f32 %v492, 1e-05
    %v495 = vrsqrt.pop %v494
    %v496 = vmul.f32 %v495, %v494
    %v497 = vmul.f32 %v496, %v495
    %v498 = vmul.f32 0.5, %v497
    %v499 = vsub.f32 1.5, %v498
    %v500 = vmul.f32 %v495, %v499
    %vm501 = vweird.f32 %v494
    %vm502 = vweird.f32 %v495
    %vm503 = vmor %vm501, %vm502
    %v504 = vsel %vm503, %v495, %v500
    %v505 = vmul.f32 %v493, %v504
    %s506 = sld [smem:[#allocation5 + $0x2]]
    %v507 = vstv %s506
    %v508 = vmul.f32 %v505, %v507
    %s509 = sld [smem:[#allocation6 + $0x2]]
    %v510 = vstv %s509
    %v511 = vadd.f32 %v508, %v510
    %512 = vmatpush.msra.mxu0 %v270
    %513 = vmatpush.msra.mxu0 %v269
    %514 = vmatpush.msra.mxu0 %v268
    %515 = vmatpush.msra.mxu0 %v267
    %516 = vmatpush.msra.mxu0 %v266
    %517 = vmatpush.msra.mxu0 %v265
    %518 = vmatpush.msra.mxu0 %v264
    %519 = vmatpush.msra.mxu0 %v263
    %520 = vmatpush.msra.mxu0 %v262
    %521 = vmatpush.msra.mxu0 %v261
    %522 = vmatpush.msra.mxu0 %v260
    %523 = vmatpush.msra.mxu0 %v259
    %524 = vmatpush.msra.mxu0 %v258
    %525 = vmatpush.msra.mxu0 %v257
    %526 = vmatpush.msra.mxu0 %v256
    %527 = vmatpush.msra.mxu0 %v255
    %528 = vmatmul.f32.gmra.mxu0 %v511
    %v529 = vpop.f32.mrf.mxu0
    %v530 = vadd.f32 %v272, %v529
    %531 = vdwg.mxu0
    %v532 = vpack.c.bf16 %v466, %v466
    %533 = vmatpush.bf16.msra.mxu0 %v334
    %534 = vmatpush.bf16.msra.mxu0 %v333
    %535 = vmatpush.bf16.msra.mxu0 %v332
    %536 = vmatpush.bf16.msra.mxu0 %v331
    %537 = vmatpush.bf16.msra.mxu0 %v330
    %538 = vmatpush.bf16.msra.mxu0 %v329
    %539 = vmatpush.bf16.msra.mxu0 %v328
    %540 = vmatpush.bf16.msra.mxu0 %v327
    %541 = vmatmul.bf16.gmra.mxu0 %v532
    %v542 = vpop.f32.mrf.mxu0
    %v543 = vadd.f32 0.0, %v542
    %v544 = vpop.f32.mrf.mxu0
    %545 = vdwg.mxu0
    %v546 = vadd.f32 %v150, %v543
    %v547 = vmul.f32 %v546, %v185
    %v548 = vtanh.pop %v547
    %v549 = vmul.f32 %v548, %v185
    %v550 = vadd.f32 %v549, %v186
    %551 = vrot.lane.b32.xlu0 %v550, 96
    %v552 = vpop.permute.xlu0 %551
    %553 = vrot.lane.b32.xlu0 %v550, 64
    %v554 = vpop.permute.xlu0 %553
    %555 = vrot.lane.b32.xlu0 %v550, 32
    %v556 = vpop.permute.xlu0 %555
    %v557 = vmul.f32 %v552, %v464
    %v558 = vmul.f32 %v550, %v554
    %v559 = vadd.f32 %v557, %v558
    %v560 = vtanh.pop %v559
    %v561 = vmul.f32 %v556, %v560
    %v562 = vmul.f32 %v561, %v193
    %563 = vadd.xlane.f32.xlu0 %v562
    %v564 = vpop.xlane.xlu0 %563
    %v565 = vrot.slane %v564, 4
    %v566 = vadd.f32 %v564, %v565
    %v567 = vrot.slane %v566, 2
    %v568 = vadd.f32 %v566, %v567
    %v569 = vrot.slane %v568, 1
    %v570 = vadd.f32 %v568, %v569
    %s571 = vtos %v570
    %v572 = vstv %s571
    %v573 = vmul.f32 %v572, 0.015625
    %v574 = vmul.f32 %v562, %v562
    %575 = vadd.xlane.f32.xlu0 %v574
    %v576 = vpop.xlane.xlu0 %575
    %v577 = vrot.slane %v576, 4
    %v578 = vadd.f32 %v576, %v577
    %v579 = vrot.slane %v578, 2
    %v580 = vadd.f32 %v578, %v579
    %v581 = vrot.slane %v580, 1
    %v582 = vadd.f32 %v580, %v581
    %s583 = vtos %v582
    %v584 = vstv %s583
    %v585 = vmul.f32 %v584, 0.015625
    %v586 = vmul.f32 %v573, %v573
    %v587 = vsub.f32 %v585, %v586
    %v588 = vsub.f32 %v561, %v573
    %v589 = vadd.f32 %v587, 1e-05
    %v590 = vrsqrt.pop %v589
    %v591 = vmul.f32 %v590, %v589
    %v592 = vmul.f32 %v591, %v590
    %v593 = vmul.f32 0.5, %v592
    %v594 = vsub.f32 1.5, %v593
    %v595 = vmul.f32 %v590, %v594
    %vm596 = vweird.f32 %v589
    %vm597 = vweird.f32 %v590
    %vm598 = vmor %vm596, %vm597
    %v599 = vsel %vm598, %v590, %v595
    %v600 = vmul.f32 %v588, %v599
    %s601 = sld [smem:[#allocation5 + $0x3]]
    %v602 = vstv %s601
    %v603 = vmul.f32 %v600, %v602
    %s604 = sld [smem:[#allocation6 + $0x3]]
    %v605 = vstv %s604
    %v606 = vadd.f32 %v603, %v605
    %607 = vmatpush.msra.mxu0 %v270
    %608 = vmatpush.msra.mxu0 %v269
    %609 = vmatpush.msra.mxu0 %v268
    %610 = vmatpush.msra.mxu0 %v267
    %611 = vmatpush.msra.mxu0 %v266
    %612 = vmatpush.msra.mxu0 %v265
    %613 = vmatpush.msra.mxu0 %v264
    %614 = vmatpush.msra.mxu0 %v263
    %615 = vmatpush.msra.mxu0 %v262
    %616 = vmatpush.msra.mxu0 %v261
    %617 = vmatpush.msra.mxu0 %v260
    %618 = vmatpush.msra.mxu0 %v259
    %619 = vmatpush.msra.mxu0 %v258
    %620 = vmatpush.msra.mxu0 %v257
    %621 = vmatpush.msra.mxu0 %v256
    %622 = vmatpush.msra.mxu0 %v255
    %623 = vmatmul.f32.gmra.mxu0 %v606
    %v624 = vpop.f32.mrf.mxu0
    %v625 = vadd.f32 %v272, %v624
    %626 = vdwg.mxu0
    %v627 = vpack.c.bf16 %v561, %v561
    %628 = vmatpush.bf16.msra.mxu0 %v334
    %629 = vmatpush.bf16.msra.mxu0 %v333
    %630 = vmatpush.bf16.msra.mxu0 %v332
    %631 = vmatpush.bf16.msra.mxu0 %v331
    %632 = vmatpush.bf16.msra.mxu0 %v330
    %633 = vmatpush.bf16.msra.mxu0 %v329
    %634 = vmatpush.bf16.msra.mxu0 %v328
    %635 = vmatpush.bf16.msra.mxu0 %v327
    %636 = vmatmul.bf16.gmra.mxu0 %v627
    %v637 = vpop.f32.mrf.mxu0
    %v638 = vadd.f32 0.0, %v637
    %v639 = vpop.f32.mrf.mxu0
    %640 = vdwg.mxu0
    %v641 = vadd.f32 %v153, %v638
    %v642 = vmul.f32 %v641, %v185
    %v643 = vtanh.pop %v642
    %v644 = vmul.f32 %v643, %v185
    %v645 = vadd.f32 %v644, %v186
    %646 = vrot.lane.b32.xlu0 %v645, 96
    %v647 = vpop.permute.xlu0 %646
    %648 = vrot.lane.b32.xlu0 %v645, 64
    %v649 = vpop.permute.xlu0 %648
    %650 = vrot.lane.b32.xlu0 %v645, 32
    %v651 = vpop.permute.xlu0 %650
    %v652 = vmul.f32 %v647, %v559
    %v653 = vmul.f32 %v645, %v649
    %v654 = vadd.f32 %v652, %v653
    %v655 = vtanh.pop %v654
    %v656 = vmul.f32 %v651, %v655
    %v657 = vmul.f32 %v656, %v193
    %658 = vadd.xlane.f32.xlu0 %v657
    %v659 = vpop.xlane.xlu0 %658
    %v660 = vrot.slane %v659, 4
    %v661 = vadd.f32 %v659, %v660
    %v662 = vrot.slane %v661, 2
    %v663 = vadd.f32 %v661, %v662
    %v664 = vrot.slane %v663, 1
    %v665 = vadd.f32 %v663, %v664
    %s666 = vtos %v665
    %v667 = vstv %s666
    %v668 = vmul.f32 %v667, 0.015625
    %v669 = vmul.f32 %v657, %v657
    %670 = vadd.xlane.f32.xlu0 %v669
    %v671 = vpop.xlane.xlu0 %670
    %v672 = vrot.slane %v671, 4
    %v673 = vadd.f32 %v671, %v672
    %v674 = vrot.slane %v673, 2
    %v675 = vadd.f32 %v673, %v674
    %v676 = vrot.slane %v675, 1
    %v677 = vadd.f32 %v675, %v676
    %s678 = vtos %v677
    %v679 = vstv %s678
    %v680 = vmul.f32 %v679, 0.015625
    %v681 = vmul.f32 %v668, %v668
    %v682 = vsub.f32 %v680, %v681
    %v683 = vsub.f32 %v656, %v668
    %v684 = vadd.f32 %v682, 1e-05
    %v685 = vrsqrt.pop %v684
    %v686 = vmul.f32 %v685, %v684
    %v687 = vmul.f32 %v686, %v685
    %v688 = vmul.f32 0.5, %v687
    %v689 = vsub.f32 1.5, %v688
    %v690 = vmul.f32 %v685, %v689
    %vm691 = vweird.f32 %v684
    %vm692 = vweird.f32 %v685
    %vm693 = vmor %vm691, %vm692
    %v694 = vsel %vm693, %v685, %v690
    %v695 = vmul.f32 %v683, %v694
    %s696 = sld [smem:[#allocation5 + $0x4]]
    %v697 = vstv %s696
    %v698 = vmul.f32 %v695, %v697
    %s699 = sld [smem:[#allocation6 + $0x4]]
    %v700 = vstv %s699
    %v701 = vadd.f32 %v698, %v700
    %702 = vmatpush.msra.mxu0 %v270
    %703 = vmatpush.msra.mxu0 %v269
    %704 = vmatpush.msra.mxu0 %v268
    %705 = vmatpush.msra.mxu0 %v267
    %706 = vmatpush.msra.mxu0 %v266
    %707 = vmatpush.msra.mxu0 %v265
    %708 = vmatpush.msra.mxu0 %v264
    %709 = vmatpush.msra.mxu0 %v263
    %710 = vmatpush.msra.mxu0 %v262
    %711 = vmatpush.msra.mxu0 %v261
    %712 = vmatpush.msra.mxu0 %v260
    %713 = vmatpush.msra.mxu0 %v259
    %714 = vmatpush.msra.mxu0 %v258
    %715 = vmatpush.msra.mxu0 %v257
    %716 = vmatpush.msra.mxu0 %v256
    %717 = vmatpush.msra.mxu0 %v255
    %718 = vmatmul.f32.gmra.mxu0 %v701
    %v719 = vpop.f32.mrf.mxu0
    %v720 = vadd.f32 %v272, %v719
    %721 = vdwg.mxu0
    %v722 = vpack.c.bf16 %v656, %v656
    %723 = vmatpush.bf16.msra.mxu0 %v334
    %724 = vmatpush.bf16.msra.mxu0 %v333
    %725 = vmatpush.bf16.msra.mxu0 %v332
    %726 = vmatpush.bf16.msra.mxu0 %v331
    %727 = vmatpush.bf16.msra.mxu0 %v330
    %728 = vmatpush.bf16.msra.mxu0 %v329
    %729 = vmatpush.bf16.msra.mxu0 %v328
    %730 = vmatpush.bf16.msra.mxu0 %v327
    %731 = vmatmul.bf16.gmra.mxu0 %v722
    %v732 = vpop.f32.mrf.mxu0
    %v733 = vadd.f32 0.0, %v732
    %v734 = vpop.f32.mrf.mxu0
    %735 = vdwg.mxu0
    %v736 = vadd.f32 %v156, %v733
    %v737 = vmul.f32 %v736, %v185
    %v738 = vtanh.pop %v737
    %v739 = vmul.f32 %v738, %v185
    %v740 = vadd.f32 %v739, %v186
    %741 = vrot.lane.b32.xlu0 %v740, 96
    %v742 = vpop.permute.xlu0 %741
    %743 = vrot.lane.b32.xlu0 %v740, 64
    %v744 = vpop.permute.xlu0 %743
    %745 = vrot.lane.b32.xlu0 %v740, 32
    %v746 = vpop.permute.xlu0 %745
    %v747 = vmul.f32 %v742, %v654
    %v748 = vmul.f32 %v740, %v744
    %v749 = vadd.f32 %v747, %v748
    %v750 = vtanh.pop %v749
    %v751 = vmul.f32 %v746, %v750
    %v752 = vmul.f32 %v751, %v193
    %753 = vadd.xlane.f32.xlu0 %v752
    %v754 = vpop.xlane.xlu0 %753
    %v755 = vrot.slane %v754, 4
    %v756 = vadd.f32 %v754, %v755
    %v757 = vrot.slane %v756, 2
    %v758 = vadd.f32 %v756, %v757
    %v759 = vrot.slane %v758, 1
    %v760 = vadd.f32 %v758, %v759
    %s761 = vtos %v760
    %v762 = vstv %s761
    %v763 = vmul.f32 %v762, 0.015625
    %v764 = vmul.f32 %v752, %v752
    %765 = vadd.xlane.f32.xlu0 %v764
    %v766 = vpop.xlane.xlu0 %765
    %v767 = vrot.slane %v766, 4
    %v768 = vadd.f32 %v766, %v767
    %v769 = vrot.slane %v768, 2
    %v770 = vadd.f32 %v768, %v769
    %v771 = vrot.slane %v770, 1
    %v772 = vadd.f32 %v770, %v771
    %s773 = vtos %v772
    %v774 = vstv %s773
    %v775 = vmul.f32 %v774, 0.015625
    %v776 = vmul.f32 %v763, %v763
    %v777 = vsub.f32 %v775, %v776
    %v778 = vsub.f32 %v751, %v763
    %v779 = vadd.f32 %v777, 1e-05
    %v780 = vrsqrt.pop %v779
    %v781 = vmul.f32 %v780, %v779
    %v782 = vmul.f32 %v781, %v780
    %v783 = vmul.f32 0.5, %v782
    %v784 = vsub.f32 1.5, %v783
    %v785 = vmul.f32 %v780, %v784
    %vm786 = vweird.f32 %v779
    %vm787 = vweird.f32 %v780
    %vm788 = vmor %vm786, %vm787
    %v789 = vsel %vm788, %v780, %v785
    %v790 = vmul.f32 %v778, %v789
    %s791 = sld [smem:[#allocation5 + $0x5]]
    %v792 = vstv %s791
    %v793 = vmul.f32 %v790, %v792
    %s794 = sld [smem:[#allocation6 + $0x5]]
    %v795 = vstv %s794
    %v796 = vadd.f32 %v793, %v795
    %797 = vmatpush.msra.mxu0 %v270
    %798 = vmatpush.msra.mxu0 %v269
    %799 = vmatpush.msra.mxu0 %v268
    %800 = vmatpush.msra.mxu0 %v267
    %801 = vmatpush.msra.mxu0 %v266
    %802 = vmatpush.msra.mxu0 %v265
    %803 = vmatpush.msra.mxu0 %v264
    %804 = vmatpush.msra.mxu0 %v263
    %805 = vmatpush.msra.mxu0 %v262
    %806 = vmatpush.msra.mxu0 %v261
    %807 = vmatpush.msra.mxu0 %v260
    %808 = vmatpush.msra.mxu0 %v259
    %809 = vmatpush.msra.mxu0 %v258
    %810 = vmatpush.msra.mxu0 %v257
    %811 = vmatpush.msra.mxu0 %v256
    %812 = vmatpush.msra.mxu0 %v255
    %813 = vmatmul.f32.gmra.mxu0 %v796
    %v814 = vpop.f32.mrf.mxu0
    %v815 = vadd.f32 %v272, %v814
    %816 = vdwg.mxu0
    %v817 = vpack.c.bf16 %v751, %v751
    %818 = vmatpush.bf16.msra.mxu0 %v334
    %819 = vmatpush.bf16.msra.mxu0 %v333
    %820 = vmatpush.bf16.msra.mxu0 %v332
    %821 = vmatpush.bf16.msra.mxu0 %v331
    %822 = vmatpush.bf16.msra.mxu0 %v330
    %823 = vmatpush.bf16.msra.mxu0 %v329
    %824 = vmatpush.bf16.msra.mxu0 %v328
    %825 = vmatpush.bf16.msra.mxu0 %v327
    %826 = vmatmul.bf16.gmra.mxu0 %v817
    %v827 = vpop.f32.mrf.mxu0
    %v828 = vadd.f32 0.0, %v827
    %v829 = vpop.f32.mrf.mxu0
    %830 = vdwg.mxu0
    %v831 = vadd.f32 %v159, %v828
    %v832 = vmul.f32 %v831, %v185
    %v833 = vtanh.pop %v832
    %v834 = vmul.f32 %v833, %v185
    %v835 = vadd.f32 %v834, %v186
    %836 = vrot.lane.b32.xlu0 %v835, 96
    %v837 = vpop.permute.xlu0 %836
    %838 = vrot.lane.b32.xlu0 %v835, 64
    %v839 = vpop.permute.xlu0 %838
    %840 = vrot.lane.b32.xlu0 %v835, 32
    %v841 = vpop.permute.xlu0 %840
    %v842 = vmul.f32 %v837, %v749
    %v843 = vmul.f32 %v835, %v839
    %v844 = vadd.f32 %v842, %v843
    %v845 = vtanh.pop %v844
    %v846 = vmul.f32 %v841, %v845
    %v847 = vmul.f32 %v846, %v193
    %848 = vadd.xlane.f32.xlu0 %v847
    %v849 = vpop.xlane.xlu0 %848
    %v850 = vrot.slane %v849, 4
    %v851 = vadd.f32 %v849, %v850
    %v852 = vrot.slane %v851, 2
    %v853 = vadd.f32 %v851, %v852
    %v854 = vrot.slane %v853, 1
    %v855 = vadd.f32 %v853, %v854
    %s856 = vtos %v855
    %v857 = vstv %s856
    %v858 = vmul.f32 %v857, 0.015625
    %v859 = vmul.f32 %v847, %v847
    %860 = vadd.xlane.f32.xlu0 %v859
    %v861 = vpop.xlane.xlu0 %860
    %v862 = vrot.slane %v861, 4
    %v863 = vadd.f32 %v861, %v862
    %v864 = vrot.slane %v863, 2
    %v865 = vadd.f32 %v863, %v864
    %v866 = vrot.slane %v865, 1
    %v867 = vadd.f32 %v865, %v866
    %s868 = vtos %v867
    %v869 = vstv %s868
    %v870 = vmul.f32 %v869, 0.015625
    %v871 = vmul.f32 %v858, %v858
    %v872 = vsub.f32 %v870, %v871
    %v873 = vsub.f32 %v846, %v858
    %v874 = vadd.f32 %v872, 1e-05
    %v875 = vrsqrt.pop %v874
    %v876 = vmul.f32 %v875, %v874
    %v877 = vmul.f32 %v876, %v875
    %v878 = vmul.f32 0.5, %v877
    %v879 = vsub.f32 1.5, %v878
    %v880 = vmul.f32 %v875, %v879
    %vm881 = vweird.f32 %v874
    %vm882 = vweird.f32 %v875
    %vm883 = vmor %vm881, %vm882
    %v884 = vsel %vm883, %v875, %v880
    %v885 = vmul.f32 %v873, %v884
    %s886 = sld [smem:[#allocation5 + $0x6]]
    %v887 = vstv %s886
    %v888 = vmul.f32 %v885, %v887
    %s889 = sld [smem:[#allocation6 + $0x6]]
    %v890 = vstv %s889
    %v891 = vadd.f32 %v888, %v890
    %892 = vmatpush.msra.mxu0 %v270
    %893 = vmatpush.msra.mxu0 %v269
    %894 = vmatpush.msra.mxu0 %v268
    %895 = vmatpush.msra.mxu0 %v267
    %896 = vmatpush.msra.mxu0 %v266
    %897 = vmatpush.msra.mxu0 %v265
    %898 = vmatpush.msra.mxu0 %v264
    %899 = vmatpush.msra.mxu0 %v263
    %900 = vmatpush.msra.mxu0 %v262
    %901 = vmatpush.msra.mxu0 %v261
    %902 = vmatpush.msra.mxu0 %v260
    %903 = vmatpush.msra.mxu0 %v259
    %904 = vmatpush.msra.mxu0 %v258
    %905 = vmatpush.msra.mxu0 %v257
    %906 = vmatpush.msra.mxu0 %v256
    %907 = vmatpush.msra.mxu0 %v255
    %908 = vmatmul.f32.gmra.mxu0 %v891
    %v909 = vpop.f32.mrf.mxu0
    %v910 = vadd.f32 %v272, %v909
    %911 = vdwg.mxu0
    %v912 = vpack.c.bf16 %v846, %v846
    %913 = vmatpush.bf16.msra.mxu0 %v334
    %914 = vmatpush.bf16.msra.mxu0 %v333
    %915 = vmatpush.bf16.msra.mxu0 %v332
    %916 = vmatpush.bf16.msra.mxu0 %v331
    %917 = vmatpush.bf16.msra.mxu0 %v330
    %918 = vmatpush.bf16.msra.mxu0 %v329
    %919 = vmatpush.bf16.msra.mxu0 %v328
    %920 = vmatpush.bf16.msra.mxu0 %v327
    %921 = vmatmul.bf16.gmra.mxu0 %v912
    %v922 = vpop.f32.mrf.mxu0
    %v923 = vadd.f32 0.0, %v922
    %v924 = vpop.f32.mrf.mxu0
    %925 = vdwg.mxu0
    %v926 = vadd.f32 %v162, %v923
    %v927 = vmul.f32 %v926, %v185
    %v928 = vtanh.pop %v927
    %v929 = vmul.f32 %v928, %v185
    %v930 = vadd.f32 %v929, %v186
    %931 = vrot.lane.b32.xlu0 %v930, 96
    %v932 = vpop.permute.xlu0 %931
    %933 = vrot.lane.b32.xlu0 %v930, 64
    %v934 = vpop.permute.xlu0 %933
    %935 = vrot.lane.b32.xlu0 %v930, 32
    %v936 = vpop.permute.xlu0 %935
    %v937 = vmul.f32 %v932, %v844
    %v938 = vmul.f32 %v930, %v934
    %v939 = vadd.f32 %v937, %v938
    %v940 = vtanh.pop %v939
    %v941 = vmul.f32 %v936, %v940
    %v942 = vmul.f32 %v941, %v193
    %943 = vadd.xlane.f32.xlu0 %v942
    %v944 = vpop.xlane.xlu0 %943
    %v945 = vrot.slane %v944, 4
    %v946 = vadd.f32 %v944, %v945
    %v947 = vrot.slane %v946, 2
    %v948 = vadd.f32 %v946, %v947
    %v949 = vrot.slane %v948, 1
    %v950 = vadd.f32 %v948, %v949
    %s951 = vtos %v950
    %v952 = vstv %s951
    %v953 = vmul.f32 %v952, 0.015625
    %v954 = vmul.f32 %v942, %v942
    %955 = vadd.xlane.f32.xlu0 %v954
    %v956 = vpop.xlane.xlu0 %955
    %v957 = vrot.slane %v956, 4
    %v958 = vadd.f32 %v956, %v957
    %v959 = vrot.slane %v958, 2
    %v960 = vadd.f32 %v958, %v959
    %v961 = vrot.slane %v960, 1
    %v962 = vadd.f32 %v960, %v961
    %s963 = vtos %v962
    %v964 = vstv %s963
    %v965 = vmul.f32 %v964, 0.015625
    %v966 = vmul.f32 %v953, %v953
    %v967 = vsub.f32 %v965, %v966
    %v968 = vsub.f32 %v941, %v953
    %v969 = vadd.f32 %v967, 1e-05
    %v970 = vrsqrt.pop %v969
    %v971 = vmul.f32 %v970, %v969
    %v972 = vmul.f32 %v971, %v970
    %v973 = vmul.f32 0.5, %v972
    %v974 = vsub.f32 1.5, %v973
    %v975 = vmul.f32 %v970, %v974
    %vm976 = vweird.f32 %v969
    %vm977 = vweird.f32 %v970
    %vm978 = vmor %vm976, %vm977
    %v979 = vsel %vm978, %v970, %v975
    %v980 = vmul.f32 %v968, %v979
    %s981 = sld [smem:[#allocation5 + $0x7]]
    %v982 = vstv %s981
    %v983 = vmul.f32 %v980, %v982
    %s984 = sld [smem:[#allocation6 + $0x7]]
    %v985 = vstv %s984
    %v986 = vadd.f32 %v983, %v985
    %987 = vmatpush.msra.mxu0 %v270
    %988 = vmatpush.msra.mxu0 %v269
    %989 = vmatpush.msra.mxu0 %v268
    %990 = vmatpush.msra.mxu0 %v267
    %991 = vmatpush.msra.mxu0 %v266
    %992 = vmatpush.msra.mxu0 %v265
    %993 = vmatpush.msra.mxu0 %v264
    %994 = vmatpush.msra.mxu0 %v263
    %995 = vmatpush.msra.mxu0 %v262
    %996 = vmatpush.msra.mxu0 %v261
    %997 = vmatpush.msra.mxu0 %v260
    %998 = vmatpush.msra.mxu0 %v259
    %999 = vmatpush.msra.mxu0 %v258
    %1000 = vmatpush.msra.mxu0 %v257
    %1001 = vmatpush.msra.mxu0 %v256
    %1002 = vmatpush.msra.mxu0 %v255
    %1003 = vmatmul.f32.gmra.mxu0 %v986
    %v1004 = vpop.f32.mrf.mxu0
    %v1005 = vadd.f32 %v272, %v1004
    %1006 = vdwg.mxu0
    %v1007 = vld [vmem:[#allocation2] sm:$0xf]
    %v1008 = vld [vmem:[#allocation2 + $0x4] sm:$0xf]
    %v1009 = vld [vmem:[#allocation2 + $0x8] sm:$0xf]
    %v1010 = vld [vmem:[#allocation2 + $0xc] sm:$0xf]
    %v1011 = vld [vmem:[#allocation2 + $0x10] sm:$0xf]
    %v1012 = vld [vmem:[#allocation2 + $0x14] sm:$0xf]
    %v1013 = vld [vmem:[#allocation2 + $0x18] sm:$0xf]
    %v1014 = vld [vmem:[#allocation2 + $0x1c] sm:$0xf]
    %v1015 = vld [vmem:[#allocation2 + $0x20] sm:$0xf]
    %v1016 = vld [vmem:[#allocation2 + $0x24] sm:$0xf]
    %v1017 = vld [vmem:[#allocation2 + $0x28] sm:$0xf]
    %v1018 = vld [vmem:[#allocation2 + $0x2c] sm:$0xf]
    %v1019 = vld [vmem:[#allocation2 + $0x30] sm:$0xf]
    %v1020 = vld [vmem:[#allocation2 + $0x34] sm:$0xf]
    %v1021 = vld [vmem:[#allocation2 + $0x38] sm:$0xf]
    %v1022 = vld [vmem:[#allocation2 + $0x3c] sm:$0xf]
    %v1023 = vmul.f32 %v292, %v185
    %v1024 = vtanh.pop %v1023
    %v1025 = vmul.f32 %v1024, %v185
    %v1026 = vadd.f32 %v1025, %v186
    %1027 = vrot.lane.b32.xlu0 %v1026, 96
    %v1028 = vpop.permute.xlu0 %1027
    %1029 = vrot.lane.b32.xlu0 %v1026, 64
    %v1030 = vpop.permute.xlu0 %1029
    %1031 = vrot.lane.b32.xlu0 %v1026, 32
    %v1032 = vpop.permute.xlu0 %1031
    %v1033 = vmul.f32 %v1028, 0.0
    %v1034 = vmul.f32 %v1026, %v1030
    %v1035 = vadd.f32 %v1033, %v1034
    %v1036 = vtanh.pop %v1035
    %v1037 = vmul.f32 %v1032, %v1036
    %v1038 = vpack.c.bf16 %v1037, %v1037
    %v1055 = vunpack.c.l.b16 %v1007
    %v1056 = vunpack.c.l.b16 %v1008
    %v1057 = vunpack.c.l.b16 %v1009
    %v1058 = vunpack.c.l.b16 %v1010
    %v1059 = vunpack.c.l.b16 %v1011
    %v1060 = vunpack.c.l.b16 %v1012
    %v1061 = vunpack.c.l.b16 %v1013
    %v1062 = vunpack.c.l.b16 %v1014
    %v1063 = vunpack.c.l.b16 %v1015
    %v1064 = vunpack.c.l.b16 %v1016
    %v1065 = vunpack.c.l.b16 %v1017
    %v1066 = vunpack.c.l.b16 %v1018
    %v1067 = vunpack.c.l.b16 %v1019
    %v1068 = vunpack.c.l.b16 %v1020
    %v1069 = vunpack.c.l.b16 %v1021
    %v1070 = vunpack.c.l.b16 %v1022
    %v1071 = vpack.c.b16 %v1056, %v1055
    %v1072 = vpack.c.b16 %v1058, %v1057
    %v1073 = vpack.c.b16 %v1060, %v1059
    %v1074 = vpack.c.b16 %v1062, %v1061
    %v1075 = vpack.c.b16 %v1064, %v1063
    %v1076 = vpack.c.b16 %v1066, %v1065
    %v1077 = vpack.c.b16 %v1068, %v1067
    %v1078 = vpack.c.b16 %v1070, %v1069
    %1087 = vmatpush.bf16.msra.mxu0 %v1078
    %1088 = vmatpush.bf16.msra.mxu0 %v1077
    %1089 = vmatpush.bf16.msra.mxu0 %v1076
    %1090 = vmatpush.bf16.msra.mxu0 %v1075
    %1091 = vmatpush.bf16.msra.mxu0 %v1074
    %1092 = vmatpush.bf16.msra.mxu0 %v1073
    %1093 = vmatpush.bf16.msra.mxu0 %v1072
    %1094 = vmatpush.bf16.msra.mxu0 %v1071
    %1095 = vmatmul.bf16.gmra.mxu0 %v1038
    %v1096 = vpop.f32.mrf.mxu0
    %v1097 = vadd.f32 0.0, %v1096
    %v1098 = vpop.f32.mrf.mxu0
    %1099 = vdwg.mxu0
    %v1100 = vadd.f32 %v435, %v1097
    %v1101 = vmul.f32 %v1100, %v185
    %v1102 = vtanh.pop %v1101
    %v1103 = vmul.f32 %v1102, %v185
    %v1104 = vadd.f32 %v1103, %v186
    %1105 = vrot.lane.b32.xlu0 %v1104, 96
    %v1106 = vpop.permute.xlu0 %1105
    %1107 = vrot.lane.b32.xlu0 %v1104, 64
    %v1108 = vpop.permute.xlu0 %1107
    %1109 = vrot.lane.b32.xlu0 %v1104, 32
    %v1110 = vpop.permute.xlu0 %1109
    %v1111 = vmul.f32 %v1106, %v1035
    %v1112 = vmul.f32 %v1104, %v1108
    %v1113 = vadd.f32 %v1111, %v1112
    %v1114 = vtanh.pop %v1113
    %v1115 = vmul.f32 %v1110, %v1114
    %v1116 = vpack.c.bf16 %v1115, %v1115
    %1117 = vmatpush.bf16.msra.mxu0 %v1078
    %1118 = vmatpush.bf16.msra.mxu0 %v1077
    %1119 = vmatpush.bf16.msra.mxu0 %v1076
    %1120 = vmatpush.bf16.msra.mxu0 %v1075
    %1121 = vmatpush.bf16.msra.mxu0 %v1074
    %1122 = vmatpush.bf16.msra.mxu0 %v1073
    %1123 = vmatpush.bf16.msra.mxu0 %v1072
    %1124 = vmatpush.bf16.msra.mxu0 %v1071
    %1125 = vmatmul.bf16.gmra.mxu0 %v1116
    %v1126 = vpop.f32.mrf.mxu0
    %v1127 = vadd.f32 0.0, %v1126
    %v1128 = vpop.f32.mrf.mxu0
    %1129 = vdwg.mxu0
    %v1130 = vadd.f32 %v530, %v1127
    %v1131 = vmul.f32 %v1130, %v185
    %v1132 = vtanh.pop %v1131
    %v1133 = vmul.f32 %v1132, %v185
    %v1134 = vadd.f32 %v1133, %v186
    %1135 = vrot.lane.b32.xlu0 %v1134, 96
    %v1136 = vpop.permute.xlu0 %1135
    %1137 = vrot.lane.b32.xlu0 %v1134, 64
    %v1138 = vpop.permute.xlu0 %1137
    %1139 = vrot.lane.b32.xlu0 %v1134, 32
    %v1140 = vpop.permute.xlu0 %1139
    %v1141 = vmul.f32 %v1136, %v1113
    %v1142 = vmul.f32 %v1134, %v1138
    %v1143 = vadd.f32 %v1141, %v1142
    %v1144 = vtanh.pop %v1143
    %v1145 = vmul.f32 %v1140, %v1144
    %v1146 = vpack.c.bf16 %v1145, %v1145
    %1147 = vmatpush.bf16.msra.mxu0 %v1078
    %1148 = vmatpush.bf16.msra.mxu0 %v1077
    %1149 = vmatpush.bf16.msra.mxu0 %v1076
    %1150 = vmatpush.bf16.msra.mxu0 %v1075
    %1151 = vmatpush.bf16.msra.mxu0 %v1074
    %1152 = vmatpush.bf16.msra.mxu0 %v1073
    %1153 = vmatpush.bf16.msra.mxu0 %v1072
    %1154 = vmatpush.bf16.msra.mxu0 %v1071
    %1155 = vmatmul.bf16.gmra.mxu0 %v1146
    %v1156 = vpop.f32.mrf.mxu0
    %v1157 = vadd.f32 0.0, %v1156
    %v1158 = vpop.f32.mrf.mxu0
    %1159 = vdwg.mxu0
    %v1160 = vadd.f32 %v625, %v1157
    %v1161 = vmul.f32 %v1160, %v185
    %v1162 = vtanh.pop %v1161
    %v1163 = vmul.f32 %v1162, %v185
    %v1164 = vadd.f32 %v1163, %v186
    %1165 = vrot.lane.b32.xlu0 %v1164, 96
    %v1166 = vpop.permute.xlu0 %1165
    %1167 = vrot.lane.b32.xlu0 %v1164, 64
    %v1168 = vpop.permute.xlu0 %1167
    %1169 = vrot.lane.b32.xlu0 %v1164, 32
    %v1170 = vpop.permute.xlu0 %1169
    %v1171 = vmul.f32 %v1166, %v1143
    %v1172 = vmul.f32 %v1164, %v1168
    %v1173 = vadd.f32 %v1171, %v1172
    %v1174 = vtanh.pop %v1173
    %v1175 = vmul.f32 %v1170, %v1174
    %v1176 = vpack.c.bf16 %v1175, %v1175
    %1177 = vmatpush.bf16.msra.mxu0 %v1078
    %1178 = vmatpush.bf16.msra.mxu0 %v1077
    %1179 = vmatpush.bf16.msra.mxu0 %v1076
    %1180 = vmatpush.bf16.msra.mxu0 %v1075
    %1181 = vmatpush.bf16.msra.mxu0 %v1074
    %1182 = vmatpush.bf16.msra.mxu0 %v1073
    %1183 = vmatpush.bf16.msra.mxu0 %v1072
    %1184 = vmatpush.bf16.msra.mxu0 %v1071
    %1185 = vmatmul.bf16.gmra.mxu0 %v1176
    %v1186 = vpop.f32.mrf.mxu0
    %v1187 = vadd.f32 0.0, %v1186
    %v1188 = vpop.f32.mrf.mxu0
    %1189 = vdwg.mxu0
    %v1190 = vadd.f32 %v720, %v1187
    %v1191 = vmul.f32 %v1190, %v185
    %v1192 = vtanh.pop %v1191
    %v1193 = vmul.f32 %v1192, %v185
    %v1194 = vadd.f32 %v1193, %v186
    %1195 = vrot.lane.b32.xlu0 %v1194, 96
    %v1196 = vpop.permute.xlu0 %1195
    %1197 = vrot.lane.b32.xlu0 %v1194, 64
    %v1198 = vpop.permute.xlu0 %1197
    %1199 = vrot.lane.b32.xlu0 %v1194, 32
    %v1200 = vpop.permute.xlu0 %1199
    %v1201 = vmul.f32 %v1196, %v1173
    %v1202 = vmul.f32 %v1194, %v1198
    %v1203 = vadd.f32 %v1201, %v1202
    %v1204 = vtanh.pop %v1203
    %v1205 = vmul.f32 %v1200, %v1204
    %v1206 = vpack.c.bf16 %v1205, %v1205
    %1207 = vmatpush.bf16.msra.mxu0 %v1078
    %1208 = vmatpush.bf16.msra.mxu0 %v1077
    %1209 = vmatpush.bf16.msra.mxu0 %v1076
    %1210 = vmatpush.bf16.msra.mxu0 %v1075
    %1211 = vmatpush.bf16.msra.mxu0 %v1074
    %1212 = vmatpush.bf16.msra.mxu0 %v1073
    %1213 = vmatpush.bf16.msra.mxu0 %v1072
    %1214 = vmatpush.bf16.msra.mxu0 %v1071
    %1215 = vmatmul.bf16.gmra.mxu0 %v1206
    %v1216 = vpop.f32.mrf.mxu0
    %v1217 = vadd.f32 0.0, %v1216
    %v1218 = vpop.f32.mrf.mxu0
    %1219 = vdwg.mxu0
    %v1220 = vadd.f32 %v815, %v1217
    %v1221 = vmul.f32 %v1220, %v185
    %v1222 = vtanh.pop %v1221
    %v1223 = vmul.f32 %v1222, %v185
    %v1224 = vadd.f32 %v1223, %v186
    %1225 = vrot.lane.b32.xlu0 %v1224, 96
    %v1226 = vpop.permute.xlu0 %1225
    %1227 = vrot.lane.b32.xlu0 %v1224, 64
    %v1228 = vpop.permute.xlu0 %1227
    %1229 = vrot.lane.b32.xlu0 %v1224, 32
    %v1230 = vpop.permute.xlu0 %1229
    %v1231 = vmul.f32 %v1226, %v1203
    %v1232 = vmul.f32 %v1224, %v1228
    %v1233 = vadd.f32 %v1231, %v1232
    %v1234 = vtanh.pop %v1233
    %v1235 = vmul.f32 %v1230, %v1234
    %v1236 = vpack.c.bf16 %v1235, %v1235
    %1237 = vmatpush.bf16.msra.mxu0 %v1078
    %1238 = vmatpush.bf16.msra.mxu0 %v1077
    %1239 = vmatpush.bf16.msra.mxu0 %v1076
    %1240 = vmatpush.bf16.msra.mxu0 %v1075
    %1241 = vmatpush.bf16.msra.mxu0 %v1074
    %1242 = vmatpush.bf16.msra.mxu0 %v1073
    %1243 = vmatpush.bf16.msra.mxu0 %v1072
    %1244 = vmatpush.bf16.msra.mxu0 %v1071
    %1245 = vmatmul.bf16.gmra.mxu0 %v1236
    %v1246 = vpop.f32.mrf.mxu0
    %v1247 = vadd.f32 0.0, %v1246
    %v1248 = vpop.f32.mrf.mxu0
    %1249 = vdwg.mxu0
    %v1250 = vadd.f32 %v910, %v1247
    %v1251 = vmul.f32 %v1250, %v185
    %v1252 = vtanh.pop %v1251
    %v1253 = vmul.f32 %v1252, %v185
    %v1254 = vadd.f32 %v1253, %v186
    %1255 = vrot.lane.b32.xlu0 %v1254, 96
    %v1256 = vpop.permute.xlu0 %1255
    %1257 = vrot.lane.b32.xlu0 %v1254, 64
    %v1258 = vpop.permute.xlu0 %1257
    %1259 = vrot.lane.b32.xlu0 %v1254, 32
    %v1260 = vpop.permute.xlu0 %1259
    %v1261 = vmul.f32 %v1256, %v1233
    %v1262 = vmul.f32 %v1254, %v1258
    %v1263 = vadd.f32 %v1261, %v1262
    %v1264 = vtanh.pop %v1263
    %v1265 = vmul.f32 %v1260, %v1264
    %v1266 = vpack.c.bf16 %v1265, %v1265
    %1267 = vmatpush.bf16.msra.mxu0 %v1078
    %1268 = vmatpush.bf16.msra.mxu0 %v1077
    %1269 = vmatpush.bf16.msra.mxu0 %v1076
    %1270 = vmatpush.bf16.msra.mxu0 %v1075
    %1271 = vmatpush.bf16.msra.mxu0 %v1074
    %1272 = vmatpush.bf16.msra.mxu0 %v1073
    %1273 = vmatpush.bf16.msra.mxu0 %v1072
    %1274 = vmatpush.bf16.msra.mxu0 %v1071
    %1275 = vmatmul.bf16.gmra.mxu0 %v1266
    %v1276 = vpop.f32.mrf.mxu0
    %v1277 = vadd.f32 0.0, %v1276
    %v1278 = vpop.f32.mrf.mxu0
    %1279 = vdwg.mxu0
    %v1280 = vadd.f32 %v1005, %v1277
    %v1281 = vmul.f32 %v1280, %v185
    %v1282 = vtanh.pop %v1281
    %v1283 = vmul.f32 %v1282, %v185
    %v1284 = vadd.f32 %v1283, %v186
    %1285 = vrot.lane.b32.xlu0 %v1284, 96
    %v1286 = vpop.permute.xlu0 %1285
    %1287 = vrot.lane.b32.xlu0 %v1284, 64
    %v1288 = vpop.permute.xlu0 %1287
    %1289 = vrot.lane.b32.xlu0 %v1284, 32
    %v1290 = vpop.permute.xlu0 %1289
    %v1291 = vmul.f32 %v1286, %v1263
    %v1292 = vmul.f32 %v1284, %v1288
    %v1293 = vadd.f32 %v1291, %v1292
    %v1294 = vtanh.pop %v1293
    %v1295 = vmul.f32 %v1290, %v1294
    %v1296 = vmul.f32 %v1295, %v193
    %1297 = vadd.xlane.f32.xlu0 %v1296
    %v1298 = vpop.xlane.xlu0 %1297
    %v1299 = vrot.slane %v1298, 4
    %v1300 = vadd.f32 %v1298, %v1299
    %v1301 = vrot.slane %v1300, 2
    %v1302 = vadd.f32 %v1300, %v1301
    %v1303 = vrot.slane %v1302, 1
    %v1304 = vadd.f32 %v1302, %v1303
    %s1305 = vtos %v1304
    %v1306 = vstv %s1305
    %v1307 = vmul.f32 %v1306, 0.015625
    %v1308 = vmul.f32 %v1296, %v1296
    %1309 = vadd.xlane.f32.xlu0 %v1308
    %v1310 = vpop.xlane.xlu0 %1309
    %v1311 = vrot.slane %v1310, 4
    %v1312 = vadd.f32 %v1310, %v1311
    %v1313 = vrot.slane %v1312, 2
    %v1314 = vadd.f32 %v1312, %v1313
    %v1315 = vrot.slane %v1314, 1
    %v1316 = vadd.f32 %v1314, %v1315
    %s1317 = vtos %v1316
    %v1318 = vstv %s1317
    %v1319 = vmul.f32 %v1318, 0.015625
    %v1320 = vmul.f32 %v1307, %v1307
    %v1321 = vsub.f32 %v1319, %v1320
    %v1322 = vsub.f32 %v1295, %v1307
    %v1323 = vadd.f32 %v1321, 1e-05
    %v1324 = vrsqrt.pop %v1323
    %v1325 = vmul.f32 %v1324, %v1323
    %v1326 = vmul.f32 %v1325, %v1324
    %v1327 = vmul.f32 0.5, %v1326
    %v1328 = vsub.f32 1.5, %v1327
    %v1329 = vmul.f32 %v1324, %v1328
    %vm1330 = vweird.f32 %v1323
    %vm1331 = vweird.f32 %v1324
    %vm1332 = vmor %vm1330, %vm1331
    %v1333 = vsel %vm1332, %v1324, %v1329
    %v1334 = vmul.f32 %v1322, %v1333
    %v1335 = vmul.f32 %v1334, %v982
    %v1336 = vadd.f32 %v1335, %v985
    %v1337 = vld [vmem:[%s9] sm:$0xff]
    %v1338 = vld [vmem:[%s9 + $0x8] sm:$0xff]
    %v1339 = vld [vmem:[%s9 + $0x10] sm:$0xff]
    %v1340 = vld [vmem:[%s9 + $0x18] sm:$0xff]
    %v1341 = vld [vmem:[%s9 + $0x20] sm:$0xff]
    %v1342 = vld [vmem:[%s9 + $0x28] sm:$0xff]
    %v1343 = vld [vmem:[%s9 + $0x30] sm:$0xff]
    %v1344 = vld [vmem:[%s9 + $0x38] sm:$0xff]
    %v1345 = vld [vmem:[%s9 + $0x40] sm:$0xff]
    %v1346 = vld [vmem:[%s9 + $0x48] sm:$0xff]
    %v1347 = vld [vmem:[%s9 + $0x50] sm:$0xff]
    %v1348 = vld [vmem:[%s9 + $0x58] sm:$0xff]
    %v1349 = vld [vmem:[%s9 + $0x60] sm:$0xff]
    %v1350 = vld [vmem:[%s9 + $0x68] sm:$0xff]
    %v1351 = vld [vmem:[%s9 + $0x70] sm:$0xff]
    %v1352 = vld [vmem:[%s9 + $0x78] sm:$0xff]
    %v1353 = vld [vmem:[%s10] sm:$0x1]
    %v1355 = vperm.slane %v1353, 0
    %1357 = vmatpush.msra.mxu0 %v1352
    %1358 = vmatpush.msra.mxu0 %v1351
    %1359 = vmatpush.msra.mxu0 %v1350
    %1360 = vmatpush.msra.mxu0 %v1349
    %1361 = vmatpush.msra.mxu0 %v1348
    %1362 = vmatpush.msra.mxu0 %v1347
    %1363 = vmatpush.msra.mxu0 %v1346
    %1364 = vmatpush.msra.mxu0 %v1345
    %1365 = vmatpush.msra.mxu0 %v1344
    %1366 = vmatpush.msra.mxu0 %v1343
    %1367 = vmatpush.msra.mxu0 %v1342
    %1368 = vmatpush.msra.mxu0 %v1341
    %1369 = vmatpush.msra.mxu0 %v1340
    %1370 = vmatpush.msra.mxu0 %v1339
    %1371 = vmatpush.msra.mxu0 %v1338
    %1372 = vmatpush.msra.mxu0 %v1337
    %1373 = vmatmul.f32.gmra.mxu0 %v1336
    %v1374 = vpop.f32.mrf.mxu0
    %v1375 = vadd.f32 %v1355, %v1374
    %1376 = vdwg.mxu0
    %v1377 = vmax.f32 %v1375, 0.0
    %v1378 = vld [vmem:[%s11] sm:$0xff]
    %v1379 = vld [vmem:[%s11 + $0x8] sm:$0xff]
    %v1380 = vld [vmem:[%s12] sm:$0x1]
    %v1382 = vperm.slane %v1380, 0
    %vm1384 = vcmask 130048
    %v1386 = vsel %vm1384, %v1377, 0
    %1388 = vmatpush.msra.mxu0 0.0
    %1389 = vmatpush.msra.mxu0 0.0
    %1390 = vmatpush.msra.mxu0 0.0
    %1391 = vmatpush.msra.mxu0 0.0
    %1392 = vmatpush.msra.mxu0 0.0
    %1393 = vmatpush.msra.mxu0 0.0
    %1394 = vmatpush.msra.mxu0 0.0
    %1395 = vmatpush.msra.mxu0 0.0
    %1396 = vmatpush.msra.mxu0 0.0
    %1397 = vmatpush.msra.mxu0 0.0
    %1398 = vmatpush.msra.mxu0 0.0
    %1399 = vmatpush.msra.mxu0 0.0
    %1400 = vmatpush.msra.mxu0 0.0
    %1401 = vmatpush.msra.mxu0 0.0
    %1402 = vmatpush.msra.mxu0 %v1379
    %1403 = vmatpush.msra.mxu0 %v1378
    %1404 = vmatmul.f32.gmra.mxu0 %v1386
    %v1405 = vpop.f32.mrf.mxu0
    %v1406 = vadd.f32 %v1382, %v1405
    %1407 = vdwg.mxu0
    %vm1408 = vcmask 15360
    %v1409 = vsel %vm1408, %v1406, -inf
    %1410 = vmax.xlane.f32.xlu0 %v1409
    %v1411 = vpop.xlane.xlu0 %1410
    %v1412 = vsub.f32 %v1406, %v1411
    %v1413 = vmul.f32 %v1412, 1.442695
    %v1414 = vpow.pop %v1413
    %v1415 = vsel %vm1408, %v1414, 0.0
    %1416 = vadd.xlane.f32.xlu0 %v1415
    %v1417 = vpop.xlane.xlu0 %1416
    %v1418 = vrcp.pop %v1417
    %v1419 = vmul.f32 %v1417, %v1418
    %v1420 = vsub.f32 1.0, %v1419
    %v1421 = vmul.f32 %v1418, %v1420
    %v1422 = vadd.f32 %v1418, %v1421
    %vm1423 = vweird.f32 %v1417
    %vm1424 = vweird.f32 %v1418
    %vm1425 = vmor %vm1423, %vm1424
    %v1426 = vsel %vm1425, %v1418, %v1422
    %v1427 = vand.u32 2147483647, %v1417
    %vm1428 = vcmp.eq.f32.partialorder %v1427, 8.507059e+37
    %v1429 = vand.u32 %v1417, 2147483648
    %v1430 = vor.u32 1.1754944e-38, %v1429
    %v1431 = vsel %vm1428, %v1430, %v1426
    %v1432 = vmul.f32 %v1414, %v1431
    %1433 = vst.msk [vmem:[%s13] sm:$0xff] %vm1408, %v1432
    // Predicated region
    $region66: #{tpu_custom_call.1} parent=1 // pred_check
      _
    $region67: #{tpu_custom_call.1} parent=1 // pred_check_branch
      %1435 = sbr.rel (0) target = $region69
    $region68: #{tpu_custom_call.1} parent=1 // pred_region
      _
    $region69: #{tpu_custom_call.1} parent=1 // pred_fallthru
      _
    // Predicated region
    $region70: #{tpu_custom_call.1} parent=1 // pred_check
      _
    $region71: #{tpu_custom_call.1} parent=1 // pred_check_branch
      %1437 = sbr.rel (0) target = $region73
    $region72: #{tpu_custom_call.1} parent=1 // pred_region
      _
    $region73: #{tpu_custom_call.1} parent=1 // pred_fallthru
      _
    %1438 = vsyncpa [#allocation3], 1
    %1439 = vsyncpa [#allocation4], 1
    %1440 = vsyncpa [#allocation7], 1

</llo_original>
